<compile_context>
chip_gen: v5e
topology: v5e:2x2
jax: 0.10.0
libtpu: 0.0.40
codegen_flags: <defaults>
</compile_context>

<pallas_src>
import functools

import jax
import jax.numpy as jnp
from jax.experimental import pallas as pl
from jax.experimental.pallas import tpu as pltpu


def _ce_per_sample(logits, labels_2d):
    """Per-sample cross entropy. logits: [B, C] f32, labels_2d: [B, 1] i32 -> [B, 1] f32.
    Padded lanes carry a -1e30 bias, so exp(logit - max) underflows to exactly 0."""
    m = jnp.max(logits, axis=-1, keepdims=True)                                   # [B,1]
    lse = jnp.log(jnp.sum(jnp.exp(logits - m), axis=-1, keepdims=True)) + m       # [B,1]
    cols = jax.lax.broadcasted_iota(jnp.int32, logits.shape, 1)                   # [B,C]
    onehot = (cols == labels_2d).astype(jnp.float32)                              # [B,C]
    picked = jnp.sum(logits * onehot, axis=-1, keepdims=True)                     # [B,1]
    return lse - picked                                                           # [B,1]


def _joint_loss_kernel(msk_ref, tok_ref, w_ref, b_ref, lab_ref, aux_ref,
                       out_ref, sum_acc, *, pc_pad):
    s = pl.program_id(1)
    ns = pl.num_programs(1)

    @pl.when(s == 0)
    def _init():
        sum_acc[...] = jnp.zeros_like(sum_acc)

    # Masked-sum pooling on the MXU: [B_t,1,S_t] x [B_t,S_t,H] -> [B_t,1,H].
    # Mask is lane-dense in the token dtype; tokens go straight into the MXU
    # (no upcast, no VPU broadcast-multiply, no cross-sublane S reduction).
    sum_acc[...] += jnp.einsum("bqs,bsh->bqh", msk_ref[...], tok_ref[...],
                               preferred_element_type=jnp.float32)

    @pl.when(s == ns - 1)
    def _finish():
        aux = aux_ref[...]                            # [B_t, 2] f32: [psw, token_count]
        psw = aux[:, 0:1]                             # [B_t, 1]
        cnt = aux[:, 1:2]                             # [B_t, 1]
        mean = sum_acc[...][:, 0, :] / jnp.maximum(cnt, 1e-9)                     # [B_t, H]

        # Single fused, lane-dense head matmul: [B_t, H] @ [H, pc_pad + ic_pad].
        # W streamed bf16, upcast once here; f32 accumulate on the MXU.
        w = w_ref[...].astype(jnp.float32)
        logits = jnp.dot(mean, w, preferred_element_type=jnp.float32) + b_ref[...]
        pc_logits = logits[:, :pc_pad]                                            # [B_t, 128*]
        ic_logits = logits[:, pc_pad:]                                            # [B_t, 128*]

        lab = lab_ref[...]                            # [B_t, 2] i32: [pseudo, intent]
        pc_per = _ce_per_sample(pc_logits, lab[:, 0:1]) * psw                     # [B_t, 1]
        ic_per = _ce_per_sample(ic_logits, lab[:, 1:2])                           # [B_t, 1]

        # Lane-dense (1, 1, 128) output row: lane 0 = weighted pseudo-CE sum over
        # this B block, lane 1 = intent-CE sum.  Full unmasked vector store.
        lanes = jax.lax.broadcasted_iota(jnp.int32, (1, out_ref.shape[-1]), 1)
        row = jnp.where(lanes == 0, jnp.sum(pc_per),
                        jnp.where(lanes == 1, jnp.sum(ic_per), 0.0))
        out_ref[...] = row.reshape(out_ref.shape)


def _vmem_limit_bytes():
    """Generation-aware VMEM limit: ~48 MiB on v7x (64 MiB physical), 64 MiB on
    v5e/v6e (128 MiB physical); always above v5e's 16 MiB scoped default."""
    cap = 64 << 20
    try:
        info = pltpu.get_tpu_info()
        cap = int(getattr(info, "vmem_capacity_bytes", cap)) or cap
    except Exception:
        pass
    return max(min(cap - (16 << 20), 64 << 20), 32 << 20)


def _choose_tiles(B, S, H, C, tok_bytes, vmem_limit):
    """Pick (b_tile, s_tile) accounting for every VMEM user.  s_tile is kept as
    large as possible (long contiguous DMA runs); b_tile is shrunk first.  When B
    allows, prefer nb >= 2 so the parallel B axis can shard across TensorCores."""
    def cands(n, align):
        return [d for d in range(n, 0, -1) if n % d == 0 and (d % align == 0 or d == n)]

    b_cands = cands(B, 8)
    s_cands = cands(S, 128)
    b_pref = [b for b in b_cands if b < B] or list(b_cands)
    if B in b_cands and B not in b_pref:
        b_pref = b_pref + [B]
    budget = vmem_limit - (4 << 20)                    # misc / scheduler headroom

    def footprint(bt, st):
        tok_buf = 2 * bt * st * H * tok_bytes          # double-buffered token tiles
        msk_buf = 2 * bt * 8 * st * tok_bytes          # (bt,1,st) mask, sublane-padded
        w_buf   = 2 * H * C * 2                        # bf16 fused head weights
        b_buf   = 2 * 8 * C * 4                        # f32 fused bias (sublane-padded)
        small   = 4 * bt * 128 * 4                     # labels + aux blocks, lane-padded
        scratch = bt * 8 * H * 4                       # (bt,1,H) f32 accumulator
        out_buf = 2 * 8 * 128 * 4
        return tok_buf + msk_buf + w_buf + b_buf + small + scratch + out_buf

    for st in s_cands:                                 # largest s_tile first ...
        for bt in b_pref:                              # ... shrink b_tile before s_tile
            if footprint(bt, st) <= budget:
                return bt, st
    return b_cands[-1], s_cands[-1]


def joint_loss(token_embeddings, attention_mask,
               pseudo_w_t, pseudo_b, intent_w_t, intent_b,
               pseudo_labels, pseudo_sample_weights, intent_labels,
               intent_classifier_weight=0.1, b_tile=None, s_tile=None):
    """token_embeddings: [B,S,H] (streamed in its NATIVE dtype -- hand in bf16 if the
    base model already produces bf16; no standalone cast is inserted here),
    attention_mask: [B,S], pseudo_w_t: [H,P] / intent_w_t: [H,I] (already transposed),
    labels: [B] int, pseudo_sample_weights: [B] float.  Returns scalar joint loss."""
    B, S, H = token_embeddings.shape
    P = pseudo_w_t.shape[1]
    I = intent_w_t.shape[1]

    pc_pad = 128 * ((P + 127) // 128)
    ic_pad = 128 * ((I + 127) // 128)
    C = pc_pad + ic_pad
    NEG = jnp.float32(-1e30)

    # Fused, lane-padded head weights (bf16) / biases (f32, padded lanes -> -1e30).
    w_cat = jnp.zeros((H, C), jnp.float32)
    w_cat = w_cat.at[:, :P].set(pseudo_w_t.astype(jnp.float32))
    w_cat = w_cat.at[:, pc_pad:pc_pad + I].set(intent_w_t.astype(jnp.float32))
    w_cat = w_cat.astype(jnp.bfloat16)
    b_cat = jnp.full((1, C), NEG, jnp.float32)
    b_cat = b_cat.at[0, :P].set(pseudo_b.astype(jnp.float32))
    b_cat = b_cat.at[0, pc_pad:pc_pad + I].set(intent_b.astype(jnp.float32))

    # Tokens streamed in their native dtype; mask streamed lane-dense as [B,1,S]
    # in the same dtype (0/1 exact in bf16) so pooling runs on the MXU.
    tok = token_embeddings
    tok_bytes = jnp.dtype(tok.dtype).itemsize
    msk = attention_mask.astype(tok.dtype).reshape(B, 1, S)

    # Per-sample side inputs merged into two tiny [B,2] blocks; token counts are
    # precomputed here (drops the per-step count reduce and its scratch buffer).
    cnt = jnp.sum(attention_mask.astype(jnp.float32), axis=1)
    aux = jnp.stack([pseudo_sample_weights.astype(jnp.float32), cnt], axis=-1)   # [B,2]
    lab = jnp.stack([pseudo_labels.astype(jnp.int32),
                     intent_labels.astype(jnp.int32)], axis=-1)                  # [B,2]

    vmem_limit = _vmem_limit_bytes()
    if b_tile is None or s_tile is None:
        bt, st = _choose_tiles(B, S, H, C, tok_bytes, vmem_limit)
        b_tile = bt if b_tile is None else b_tile
        s_tile = st if s_tile is None else s_tile
    assert B % b_tile == 0 and (b_tile % 8 == 0 or b_tile == B), "bad b_tile"
    assert S % s_tile == 0 and (s_tile % 128 == 0 or s_tile == S), "bad s_tile"
    nb, ns = B // b_tile, S // s_tile

    kernel = functools.partial(_joint_loss_kernel, pc_pad=pc_pad)

    partials = pl.pallas_call(
        kernel,
        out_shape=jax.ShapeDtypeStruct((nb, 1, 128), jnp.float32),
        grid_spec=pltpu.PrefetchScalarGridSpec(
            num_scalar_prefetch=0,
            grid=(nb, ns),
            in_specs=[
                pl.BlockSpec((b_tile, 1, s_tile), lambda b, s: (b, 0, s)),   # mask
                pl.BlockSpec((b_tile, s_tile, H), lambda b, s: (b, s, 0)),   # tokens
                pl.BlockSpec((H, C), lambda b, s: (0, 0)),                   # fused W (bf16)
                pl.BlockSpec((1, C), lambda b, s: (0, 0)),                   # fused bias
                pl.BlockSpec((b_tile, 2), lambda b, s: (b, 0)),              # labels
                pl.BlockSpec((b_tile, 2), lambda b, s: (b, 0)),              # psw + count
            ],
            out_specs=pl.BlockSpec((1, 1, 128), lambda b, s: (b, 0, 0)),
            scratch_shapes=[pltpu.VMEM((b_tile, 1, H), jnp.float32)],        # pooled sum
        ),
        compiler_params=pltpu.CompilerParams(
            dimension_semantics=("parallel", "arbitrary"),
            vmem_limit_bytes=vmem_limit),
        cost_estimate=pl.CostEstimate(
            flops=2 * B * S * H + 2 * B * H * C,
            transcendentals=B * C,
            bytes_accessed=B * S * H * tok_bytes + B * S * tok_bytes
                           + H * C * 2 + C * 4 + B * 16 + nb * 128 * 4),
    )(msk, tok, w_cat, b_cat, lab, aux)

    # Tiny finalization in plain JAX: mean over batch + weighted blend.
    pc_loss = jnp.sum(partials[:, 0, 0]) / B
    ic_loss = jnp.sum(partials[:, 0, 1]) / B
    w = jnp.float32(intent_classifier_weight)
    return pc_loss * (1.0 - w) + ic_loss * w


def _reference(tok, attention_mask,
               pseudo_w_t, pseudo_b, intent_w_t, intent_b,
               pseudo_labels, pseudo_sample_weights, intent_labels, w):
    tok = tok.astype(jnp.float32)
    mask_e = attention_mask.astype(jnp.float32)[:, :, None]
    mean = jnp.sum(tok * mask_e, 1) / jnp.maximum(jnp.sum(mask_e, 1), 1e-9)
    hi = jax.lax.Precision.HIGHEST
    pc_logits = jnp.dot(mean, pseudo_w_t, precision=hi) + pseudo_b
    ic_logits = jnp.dot(mean, intent_w_t, precision=hi) + intent_b

    def ce(logits, labels):
        lse = jax.scipy.special.logsumexp(logits, axis=-1)
        picked = jnp.take_along_axis(logits, labels[:, None], axis=-1)[:, 0]
        return lse - picked

    pc_loss = jnp.mean(ce(pc_logits, pseudo_labels) * pseudo_sample_weights)
    ic_loss = jnp.mean(ce(ic_logits, intent_labels))
    return pc_loss * (1 - w) + ic_loss * w


if __name__ == "__main__":
    # Small deterministic example; shapes chosen so the (B, S) grid is exercised
    # with tile shapes that satisfy the (8, 128) block-alignment rules.
    B, S, H = 16, 256, 32
    V = 64
    NUM_PSEUDO = 6
    NUM_INTENT = 4
    W_INTENT = 0.1

    key = jax.random.PRNGKey(0)
    k_emb, k_ids, k_len, k_pw, k_iw, k_psw, k_pl, k_il = jax.random.split(key, 8)

    # Stand-in base model: deterministic embedding table lookup (plain-JAX glue).
    # TODO(synk): real transformer base_model not reimplemented here.
    embed_table = jax.random.normal(k_emb, (V, H), jnp.float32) * 0.02
    input_ids = jax.random.randint(k_ids, (B, S), 0, V)
    token_embeddings = jnp.take(embed_table, input_ids, axis=0)          # [B,S,H] f32

    # Per-sample padding lengths (>= 1 so every row has at least one real token).
    lengths = jax.random.randint(k_len, (B,), 1, S + 1)
    attention_mask = (jnp.arange(S)[None, :] < lengths[:, None]).astype(jnp.float32)

    # ClassificationHead params: out_proj weight ~ N(0, 0.02), bias = 0.
    pseudo_w = jax.random.normal(k_pw, (NUM_PSEUDO, H), jnp.float32) * 0.02   # [out,in]
    pseudo_b = jnp.zeros((NUM_PSEUDO,), jnp.float32)
    intent_w = jax.random.normal(k_iw, (NUM_INTENT, H), jnp.float32) * 0.02
    intent_b = jnp.zeros((NUM_INTENT,), jnp.float32)

    pseudo_labels = jax.random.randint(k_pl, (B,), 0, NUM_PSEUDO)
    intent_labels = jax.random.randint(k_il, (B,), 0, NUM_INTENT)
    pseudo_sample_weights = jax.random.uniform(k_psw, (B,), jnp.float32) + 0.5

    total = joint_loss(token_embeddings, attention_mask,
                       pseudo_w.T, pseudo_b, intent_w.T, intent_b,
                       pseudo_labels, pseudo_sample_weights, intent_labels,
                       intent_classifier_weight=W_INTENT,
                       b_tile=8, s_tile=128)          # grid = (2, 2) for the demo
    total = jax.block_until_ready(total)

    ref = _reference(token_embeddings, attention_mask,
                     pseudo_w.T, pseudo_b, intent_w.T, intent_b,
                     pseudo_labels, pseudo_sample_weights, intent_labels, W_INTENT)

    assert jnp.allclose(total, ref, atol=1e-3, rtol=1e-3), (total, ref)
    print("KERNEL_OK")
</pallas_src>

<mosaic_0001>
module attributes {stable_mosaic.version = 11 : i64} {
  func.func @_joint_loss_kernel(%arg0: i32, %arg1: i32, %arg2: memref<8x1x128xf32, #tpu.memory_space<vmem>>, %arg3: memref<8x128x32xf32, #tpu.memory_space<vmem>>, %arg4: memref<32x256xbf16, #tpu.memory_space<vmem>>, %arg5: memref<1x256xf32, #tpu.memory_space<vmem>>, %arg6: memref<8x2xi32, #tpu.memory_space<vmem>>, %arg7: memref<8x2xf32, #tpu.memory_space<vmem>>, %arg8: memref<1x1x128xf32, #tpu.memory_space<vmem>>, %arg9: memref<8x1x32xf32, #tpu.memory_space<vmem>>) attributes {dimension_semantics = [#tpu.dimension_semantics<parallel>, #tpu.dimension_semantics<arbitrary>], iteration_bounds = array<i64: 2, 2>, scalar_prefetch = 0 : i64, scratch_operands = 1 : i64, tpu.core_type = #tpu.core_type<tc>, window_params = [{transform_indices = @transform_0, window_bounds = array<i64: 8, 1, 128>}, {transform_indices = @transform_1, window_bounds = array<i64: 8, 128, 32>}, {pipeline_mode = #tpu.pipeline_mode<synchronous>, transform_indices = @transform_2, window_bounds = array<i64: 32, 256>}, {pipeline_mode = #tpu.pipeline_mode<synchronous>, transform_indices = @transform_3, window_bounds = array<i64: 1, 256>}, {transform_indices = @transform_4, window_bounds = array<i64: 8, 2>}, {transform_indices = @transform_5, window_bounds = array<i64: 8, 2>}, {transform_indices = @transform_6, window_bounds = array<i64: 1, 1, 128>}]} {
    %c0_i32 = arith.constant 0 : i32
    %0 = arith.cmpi eq, %arg1, %c0_i32 : i32
    %1 = arith.extui %0 : i1 to i32
    %c0_i32_0 = arith.constant 0 : i32
    %2 = arith.cmpi ne, %1, %c0_i32_0 : i32
    scf.if %2 {
      %cst_13 = arith.constant 0.000000e+00 : f32
      %12 = vector.broadcast %cst_13 : f32 to vector<8x1x32xf32>
      %c0_14 = arith.constant 0 : index
      %c0_15 = arith.constant 0 : index
      %c0_16 = arith.constant 0 : index
      %13 = vector.load %arg9[%c0_14, %c0_15, %c0_16] : memref<8x1x32xf32, #tpu.memory_space<vmem>>, vector<8x1x32xf32>
      tpu.vector_store %arg9[%c0_14, %c0_15, %c0_16], %12 {strides = array<i32>} : memref<8x1x32xf32, #tpu.memory_space<vmem>>, vector<8x1x32xf32>,
    } else {
    }
    %c0 = arith.constant 0 : index
    %c0_1 = arith.constant 0 : index
    %c0_2 = arith.constant 0 : index
    %3 = vector.load %arg9[%c0, %c0_1, %c0_2] : memref<8x1x32xf32, #tpu.memory_space<vmem>>, vector<8x1x32xf32>
    %c0_3 = arith.constant 0 : index
    %c0_4 = arith.constant 0 : index
    %c0_5 = arith.constant 0 : index
    %4 = vector.load %arg2[%c0_3, %c0_4, %c0_5] : memref<8x1x128xf32, #tpu.memory_space<vmem>>, vector<8x1x128xf32>
    %c0_6 = arith.constant 0 : index
    %c0_7 = arith.constant 0 : index
    %c0_8 = arith.constant 0 : index
    %5 = vector.load %arg3[%c0_6, %c0_7, %c0_8] : memref<8x128x32xf32, #tpu.memory_space<vmem>>, vector<8x128x32xf32>
    "tpu.trace_start"() <{level = 10 : i32, message = "bqs,bsh->bqh"}> : () -> ()
    %cst = arith.constant dense<0.000000e+00> : vector<8x1x32xf32>
    %6 = tpu.matmul %4, %5, %cst {dimension_numbers = #tpu.dot_dimension_numbers<[2], [1], [1], [2], [0, 0, 0, 1, 1, 2], [0], [0]>} : vector<8x1x128xf32>, vector<8x128x32xf32>, vector<8x1x32xf32> -> vector<8x1x32xf32>
    "tpu.trace_stop"() : () -> ()
    %7 = arith.addf %3, %6 : vector<8x1x32xf32>
    %c0_9 = arith.constant 0 : index
    %c0_10 = arith.constant 0 : index
    %c0_11 = arith.constant 0 : index
    %8 = vector.load %arg9[%c0_9, %c0_10, %c0_11] : memref<8x1x32xf32, #tpu.memory_space<vmem>>, vector<8x1x32xf32>
    tpu.vector_store %arg9[%c0_9, %c0_10, %c0_11], %7 {strides = array<i32>} : memref<8x1x32xf32, #tpu.memory_space<vmem>>, vector<8x1x32xf32>,
    %c1_i32 = arith.constant 1 : i32
    %9 = arith.cmpi eq, %arg1, %c1_i32 : i32
    %10 = arith.extui %9 : i1 to i32
    %c0_i32_12 = arith.constant 0 : i32
    %11 = arith.cmpi ne, %10, %c0_i32_12 : i32
    scf.if %11 {
      %c0_13 = arith.constant 0 : index
      %c0_14 = arith.constant 0 : index
      %12 = vector.load %arg7[%c0_13, %c0_14] : memref<8x2xf32, #tpu.memory_space<vmem>>, vector<8x2xf32>
      %13 = vector.extract_strided_slice %12 {offsets = [0, 0], sizes = [8, 1], strides = [1, 1]} : vector<8x2xf32> to vector<8x1xf32>
      %14 = vector.extract_strided_slice %12 {offsets = [0, 1], sizes = [8, 1], strides = [1, 1]} : vector<8x2xf32> to vector<8x1xf32>
      %c0_15 = arith.constant 0 : index
      %c0_16 = arith.constant 0 : index
      %c0_17 = arith.constant 0 : index
      %15 = vector.load %arg9[%c0_15, %c0_16, %c0_17] : memref<8x1x32xf32, #tpu.memory_space<vmem>>, vector<8x1x32xf32>
      %16 = vector.shape_cast %15 : vector<8x1x32xf32> to vector<8x32xf32>
      %cst_18 = arith.constant 9.99999971E-10 : f32
      %17 = vector.broadcast %cst_18 : f32 to vector<8x1xf32>
      %18 = arith.maximumf %14, %17 : vector<8x1xf32>
      %19 = vector.broadcast %18 : vector<8x1xf32> to vector<8x32xf32>
      %20 = arith.divf %16, %19 : vector<8x32xf32>
      %c0_19 = arith.constant 0 : index
      %c0_20 = arith.constant 0 : index
      %21 = vector.load %arg4[%c0_19, %c0_20] : memref<32x256xbf16, #tpu.memory_space<vmem>>, vector<32x256xbf16>
      %22 = arith.extf %21 : vector<32x256xbf16> to vector<32x256xf32>
      %cst_21 = arith.constant dense<0.000000e+00> : vector<8x256xf32>
      %23 = tpu.matmul %20, %22, %cst_21 {dimension_numbers = #tpu.dot_dimension_numbers<[1], [0], [0], [1], [0, 0, 1, 1], [], []>} : vector<8x32xf32>, vector<32x256xf32>, vector<8x256xf32> -> vector<8x256xf32>
      %c0_22 = arith.constant 0 : index
      %c0_23 = arith.constant 0 : index
      %24 = vector.load %arg5[%c0_22, %c0_23] : memref<1x256xf32, #tpu.memory_space<vmem>>, vector<1x256xf32>
      %25 = vector.broadcast %24 : vector<1x256xf32> to vector<8x256xf32>
      %26 = arith.addf %23, %25 : vector<8x256xf32>
      %27 = vector.extract_strided_slice %26 {offsets = [0, 0], sizes = [8, 128], strides = [1, 1]} : vector<8x256xf32> to vector<8x128xf32>
      %28 = vector.extract_strided_slice %26 {offsets = [0, 128], sizes = [8, 128], strides = [1, 1]} : vector<8x256xf32> to vector<8x128xf32>
      %c0_24 = arith.constant 0 : index
      %c0_25 = arith.constant 0 : index
      %29 = vector.load %arg6[%c0_24, %c0_25] : memref<8x2xi32, #tpu.memory_space<vmem>>, vector<8x2xi32>
      %30 = vector.extract_strided_slice %29 {offsets = [0, 0], sizes = [8, 1], strides = [1, 1]} : vector<8x2xi32> to vector<8x1xi32>
      %cst_26 = arith.constant dense<0xFF800000> : vector<8xf32>
      %31 = vector.multi_reduction <maximumf>, %27, %cst_26 [1] : vector<8x128xf32> to vector<8xf32>
      %32 = vector.shape_cast %31 : vector<8xf32> to vector<8x1xf32>
      %33 = vector.broadcast %32 : vector<8x1xf32> to vector<8x128xf32>
      %34 = arith.subf %27, %33 : vector<8x128xf32>
      %35 = math.exp %34 : vector<8x128xf32>
      %cst_27 = arith.constant dense<0.000000e+00> : vector<8xf32>
      %36 = vector.multi_reduction <add>, %35, %cst_27 [1] : vector<8x128xf32> to vector<8xf32>
      %37 = vector.shape_cast %36 : vector<8xf32> to vector<8x1xf32>
      %38 = math.log %37 : vector<8x1xf32>
      %39 = arith.addf %38, %32 : vector<8x1xf32>
      %40 = tpu.iota {dimensions = array<i32: 1>} : vector<8x128xi32>
      %41 = vector.broadcast %30 : vector<8x1xi32> to vector<8x128xi32>
      %42 = arith.cmpi eq, %40, %41 : vector<8x128xi32>
      %43 = arith.extui %42 : vector<8x128xi1> to vector<8x128xi32>
      %44 = arith.sitofp %43 : vector<8x128xi32> to vector<8x128xf32>
      %45 = arith.mulf %27, %44 : vector<8x128xf32>
      %cst_28 = arith.constant dense<0.000000e+00> : vector<8xf32>
      %46 = vector.multi_reduction <add>, %45, %cst_28 [1] : vector<8x128xf32> to vector<8xf32>
      %47 = vector.shape_cast %46 : vector<8xf32> to vector<8x1xf32>
      %48 = arith.subf %39, %47 : vector<8x1xf32>
      %49 = arith.mulf %48, %13 : vector<8x1xf32>
      %50 = vector.extract_strided_slice %29 {offsets = [0, 1], sizes = [8, 1], strides = [1, 1]} : vector<8x2xi32> to vector<8x1xi32>
      %cst_29 = arith.constant dense<0xFF800000> : vector<8xf32>
      %51 = vector.multi_reduction <maximumf>, %28, %cst_29 [1] : vector<8x128xf32> to vector<8xf32>
      %52 = vector.shape_cast %51 : vector<8xf32> to vector<8x1xf32>
      %53 = vector.broadcast %52 : vector<8x1xf32> to vector<8x128xf32>
      %54 = arith.subf %28, %53 : vector<8x128xf32>
      %55 = math.exp %54 : vector<8x128xf32>
      %cst_30 = arith.constant dense<0.000000e+00> : vector<8xf32>
      %56 = vector.multi_reduction <add>, %55, %cst_30 [1] : vector<8x128xf32> to vector<8xf32>
      %57 = vector.shape_cast %56 : vector<8xf32> to vector<8x1xf32>
      %58 = math.log %57 : vector<8x1xf32>
      %59 = arith.addf %58, %52 : vector<8x1xf32>
      %60 = tpu.iota {dimensions = array<i32: 1>} : vector<8x128xi32>
      %61 = vector.broadcast %50 : vector<8x1xi32> to vector<8x128xi32>
      %62 = arith.cmpi eq, %60, %61 : vector<8x128xi32>
      %63 = arith.extui %62 : vector<8x128xi1> to vector<8x128xi32>
      %64 = arith.sitofp %63 : vector<8x128xi32> to vector<8x128xf32>
      %65 = arith.mulf %28, %64 : vector<8x128xf32>
      %cst_31 = arith.constant dense<0.000000e+00> : vector<8xf32>
      %66 = vector.multi_reduction <add>, %65, %cst_31 [1] : vector<8x128xf32> to vector<8xf32>
      %67 = vector.shape_cast %66 : vector<8xf32> to vector<8x1xf32>
      %68 = arith.subf %59, %67 : vector<8x1xf32>
      %69 = tpu.iota {dimensions = array<i32: 1>} : vector<1x128xi32>
      %c0_i32_32 = arith.constant 0 : i32
      %70 = vector.broadcast %c0_i32_32 : i32 to vector<1x128xi32>
      %71 = arith.cmpi eq, %69, %70 : vector<1x128xi32>
      %72 = vector.shape_cast %49 : vector<8x1xf32> to vector<1x8x1xf32>
      %cst_33 = arith.constant dense<0.000000e+00> : vector<1xf32>
      %73 = vector.multi_reduction <add>, %72, %cst_33 [1, 2] : vector<1x8x1xf32> to vector<1xf32>
      %74 = vector.shape_cast %73 : vector<1xf32> to vector<1x1x1xf32>
      %75 = vector.extract %74[0, 0, 0] : f32 from vector<1x1x1xf32>
      %c1_i32_34 = arith.constant 1 : i32
      %76 = vector.broadcast %c1_i32_34 : i32 to vector<1x128xi32>
      %77 = arith.cmpi eq, %69, %76 : vector<1x128xi32>
      %78 = vector.shape_cast %68 : vector<8x1xf32> to vector<1x8x1xf32>
      %cst_35 = arith.constant dense<0.000000e+00> : vector<1xf32>
      %79 = vector.multi_reduction <add>, %78, %cst_35 [1, 2] : vector<1x8x1xf32> to vector<1xf32>
      %80 = vector.shape_cast %79 : vector<1xf32> to vector<1x1x1xf32>
      %81 = vector.extract %80[0, 0, 0] : f32 from vector<1x1x1xf32>
      %cst_36 = arith.constant 0.000000e+00 : f32
      %82 = vector.broadcast %81 : f32 to vector<1x128xf32>
      %83 = vector.broadcast %cst_36 : f32 to vector<1x128xf32>
      %84 = arith.select %77, %82, %83 : vector<1x128xi1>, vector<1x128xf32>
      %85 = vector.broadcast %75 : f32 to vector<1x128xf32>
      %86 = arith.select %71, %85, %84 : vector<1x128xi1>, vector<1x128xf32>
      %87 = vector.shape_cast %86 : vector<1x128xf32> to vector<1x1x128xf32>
      %c0_37 = arith.constant 0 : index
      %c0_38 = arith.constant 0 : index
      %c0_39 = arith.constant 0 : index
      %88 = vector.load %arg8[%c0_37, %c0_38, %c0_39] : memref<1x1x128xf32, #tpu.memory_space<vmem>>, vector<1x1x128xf32>
      tpu.vector_store %arg8[%c0_37, %c0_38, %c0_39], %87 {strides = array<i32>} : memref<1x1x128xf32, #tpu.memory_space<vmem>>, vector<1x1x128xf32>,
    } else {
    }
    return
  }
  func.func @transform_0(%arg0: i32, %arg1: i32) -> (i32, i32, i32) {
    %c0_i32 = arith.constant 0 : i32
    %c0_i32_0 = arith.constant 0 : i32
    return %arg0, %c0_i32, %arg1 : i32, i32, i32
  }
  func.func @transform_1(%arg0: i32, %arg1: i32) -> (i32, i32, i32) {
    %c0_i32 = arith.constant 0 : i32
    %c0_i32_0 = arith.constant 0 : i32
    return %arg0, %arg1, %c0_i32 : i32, i32, i32
  }
  func.func @transform_2(%arg0: i32, %arg1: i32) -> (i32, i32) {
    %c0_i32 = arith.constant 0 : i32
    %c0_i32_0 = arith.constant 0 : i32
    %c0_i32_1 = arith.constant 0 : i32
    return %c0_i32, %c0_i32_0 : i32, i32
  }
  func.func @transform_3(%arg0: i32, %arg1: i32) -> (i32, i32) {
    %c0_i32 = arith.constant 0 : i32
    %c0_i32_0 = arith.constant 0 : i32
    %c0_i32_1 = arith.constant 0 : i32
    return %c0_i32, %c0_i32_0 : i32, i32
  }
  func.func @transform_4(%arg0: i32, %arg1: i32) -> (i32, i32) {
    %c0_i32 = arith.constant 0 : i32
    %c0_i32_0 = arith.constant 0 : i32
    return %arg0, %c0_i32 : i32, i32
  }
  func.func @transform_5(%arg0: i32, %arg1: i32) -> (i32, i32) {
    %c0_i32 = arith.constant 0 : i32
    %c0_i32_0 = arith.constant 0 : i32
    return %arg0, %c0_i32 : i32, i32
  }
  func.func @transform_6(%arg0: i32, %arg1: i32) -> (i32, i32, i32) {
    %c0_i32 = arith.constant 0 : i32
    %c0_i32_0 = arith.constant 0 : i32
    %c0_i32_1 = arith.constant 0 : i32
    return %arg0, %c0_i32, %c0_i32_0 : i32, i32, i32
  }
}

</mosaic_0001>

<llo_original>
// kernel: tpu_custom_call.1
$region0: #{tpu_custom_call.1}
  #allocation0 [shape = 'u32[]', space=smem, size = 0x4, offset = 0x4, fixed_abs, tag = 'smem constant byte address 0x4 - core index']
  #allocation1 [shape = 'u32[72,128]{1,0:T(1,128)}', space=vmem, size = 0x9000, scoped, tag = 'internal scratch']
  #allocation2 [shape = 'f32[8,1,32]{2,1,0:T(1,128)}', space=vmem, size = 0x1000, scoped, tag = 'scratch operand']
  %s0 = inlined_call_operand.vmem [shape: f32[16,1,256], index: 0, kind: input, shape index: {}]
  %s1 = inlined_call_operand.vmem [shape: f32[16,256,32], index: 1, kind: input, shape index: {}]
  %s2 = inlined_call_operand.vmem [shape: bf16[32,256], index: 2, kind: input, shape index: {}]
  %s3 = inlined_call_operand.vmem [shape: f32[1,256], index: 3, kind: input, shape index: {}]
  %s4 = inlined_call_operand.vmem [shape: s32[16,2], index: 4, kind: input, shape index: {}]
  %s5 = inlined_call_operand.vmem [shape: f32[16,2], index: 5, kind: input, shape index: {}]
  %s6 = inlined_call_operand.hbm [shape: f32[2,1,128], index: 6, kind: output, shape index: {}]
  %s7 = sld [smem:[#allocation0]]
  $region144: #{tpu_custom_call.1} parent=0
    _
  %s9 = ssub.s32 1, %s7
  %s10 = scalar_select 0, %s9, %s7
  $region1: #{tpu_custom_call.1} parent=0
    #allocation3 [shape = 'u8[8192]{0}', space=vmem, size = 0x2000, scoped, tag = 'input window, operand 0']
    #allocation4 [shape = 'u8[1048576]{0}', space=vmem, size = 0x100000, scoped, tag = 'input window, operand 1']
    #allocation5 [shape = 'u8[1024]{0}', space=vmem, size = 0x400, scoped, tag = 'output window, operand 0']
    #allocation6 [shape = 's32[2]{0}', space=sflag, size = 0x8, scoped, tag = 'scoped memory for tpu_custom_call.1']
    %11 = vsyncpa [#allocation6], 0
    %s12 = scalar_lea.sflag [#allocation6], 1
    %13 = vsyncpa %s12, 0
    loop: start=0, step=1, limit=6
    $region2: #{tpu_custom_call.1} parent=1 // loop_pre_header
      _
    $region3: #{tpu_custom_call.1} parent=1 // loop_header
      %s15 = sphi 0, %s19
      %p16 = scmp.ge.s32.totalorder %s15, 6
      %s22 = sphi 0, %s34
      %s23 = sphi 0, %s30
      %s24 = sphi 0, %s22
      %s25 = sphi 0, %s23
      %s26 = sphi 0, %s24
      %s27 = sphi 0, %s25
      %s39 = sphi 0, %s41
      %s42 = sphi 0, %s39
      %s43 = sphi 0, %s42
      %s59 = sphi 0, %s43
      %s67 = sphi 0, %s69
      %s70 = sphi 0, %s67
      %s71 = sphi 0, %s70
      %s87 = sphi 0, %s71
      %s91 = sphi 0, %s91
      %s93 = sphi 0, %s91
      %s94 = sphi 0, %s93
      %s108 = sphi 0, %s94
      %s112 = sphi 0, %s112
      %s114 = sphi 0, %s112
      %s115 = sphi 0, %s114
      %s129 = sphi 0, %s115
      %s135 = sphi 0, %s137
      %s138 = sphi 0, %s135
      %s139 = sphi 0, %s138
      %s155 = sphi 0, %s139
      %s161 = sphi 0, %s163
      %s164 = sphi 0, %s161
      %s165 = sphi 0, %s164
      %s181 = sphi 0, %s165
      %s187 = sphi 0, %s189
      %s190 = sphi 0, %s187
      %s191 = sphi 0, %s190
      %s207 = sphi 0, %s191
    $region4: #{tpu_custom_call.1} parent=1 // loop_header_branch
      %18 = sbr.rel (%p16) target = $region8
    $region5: #{tpu_custom_call.1} parent=1 // loop_body
      %s20 = ssub.s32 %s15, 1
      %s21 = ssub.s32 %s15, 2
      %s28 = sadd.s32 1, %s23
      %p29 = scmp.ge.s32.totalorder %s28, 2
      %s30 = scalar_select %p29, 0, %s28
      %s31 = sadd.s32 1, %s22
      %s32 = scalar_select %p29, %s31, %s22
      %p33 = scmp.ge.s32.totalorder %s32, 2
      %s34 = scalar_select %p33, 0, %s32
      %s35 = ssub.s32 %s22, %s34
      %s36 = ssub.s32 %s23, %s30
      %s37 = sor.u32 %s35, %s36
      %p38 = scmp.eq.s32.totalorder %s37, 0
      %s40 = sadd.s32 %s39, 1
      %s41 = scalar_select %p38, %s39, %s40
      %p44 = pneg %p38
      %p45 = scmp.eq.s32.totalorder %s15, 3
      %p46 = por %p44, %p45
      %p47 = scmp.ne.s32.totalorder %s39, %s42
      %p48 = scmp.eq.s32.totalorder %s15, 0
      %p49 = por %p47, %p48
      %p50 = scmp.ne.s32.totalorder %s39, %s42
      %p51 = scmp.eq.s32.totalorder %s20, 3
      %p52 = por %p50, %p51
      %p53 = scmp.ne.s32.totalorder %s42, %s43
      %p54 = scmp.eq.s32.totalorder %s20, 0
      %p55 = por %p53, %p54
      %p56 = scmp.ne.s32.totalorder %s42, %s43
      %p57 = scmp.eq.s32.totalorder %s21, 3
      %p58 = por %p56, %p57
      %p60 = scmp.ne.s32.totalorder %s43, %s59
      %p61 = scmp.eq.s32.totalorder %s21, 0
      %p62 = por %p60, %p61
      %s63 = ssub.s32 %s22, %s34
      %s64 = ssub.s32 %s23, %s30
      %s65 = sor.u32 %s63, %s64
      %p66 = scmp.eq.s32.totalorder %s65, 0
      %s68 = sadd.s32 %s67, 1
      %s69 = scalar_select %p66, %s67, %s68
      %p72 = pneg %p66
      %p73 = scmp.eq.s32.totalorder %s15, 3
      %p74 = por %p72, %p73
      %p75 = scmp.ne.s32.totalorder %s67, %s70
      %p76 = scmp.eq.s32.totalorder %s15, 0
      %p77 = por %p75, %p76
      %p78 = scmp.ne.s32.totalorder %s67, %s70
      %p79 = scmp.eq.s32.totalorder %s20, 3
      %p80 = por %p78, %p79
      %p81 = scmp.ne.s32.totalorder %s70, %s71
      %p82 = scmp.eq.s32.totalorder %s20, 0
      %p83 = por %p81, %p82
      %p84 = scmp.ne.s32.totalorder %s70, %s71
      %p85 = scmp.eq.s32.totalorder %s21, 3
      %p86 = por %p84, %p85
      %p88 = scmp.ne.s32.totalorder %s71, %s87
      %p89 = scmp.eq.s32.totalorder %s21, 0
      %p90 = por %p88, %p89
      %s92 = sadd.s32 %s91, 1
      %p95 = scmp.eq.s32.totalorder %s15, 3
      %p96 = scmp.ne.s32.totalorder %s91, %s93
      %p97 = scmp.eq.s32.totalorder %s15, 0
      %p98 = por %p96, %p97
      %p99 = scmp.ne.s32.totalorder %s91, %s93
      %p100 = scmp.eq.s32.totalorder %s20, 3
      %p101 = por %p99, %p100
      %p102 = scmp.ne.s32.totalorder %s93, %s94
      %p103 = scmp.eq.s32.totalorder %s20, 0
      %p104 = por %p102, %p103
      %p105 = scmp.ne.s32.totalorder %s93, %s94
      %p106 = scmp.eq.s32.totalorder %s21, 3
      %p107 = por %p105, %p106
      %p109 = scmp.ne.s32.totalorder %s94, %s108
      %p110 = scmp.eq.s32.totalorder %s21, 0
      %p111 = por %p109, %p110
      %s113 = sadd.s32 %s112, 1
      %p116 = scmp.eq.s32.totalorder %s15, 3
      %p117 = scmp.ne.s32.totalorder %s112, %s114
      %p118 = scmp.eq.s32.totalorder %s15, 0
      %p119 = por %p117, %p118
      %p120 = scmp.ne.s32.totalorder %s112, %s114
      %p121 = scmp.eq.s32.totalorder %s20, 3
      %p122 = por %p120, %p121
      %p123 = scmp.ne.s32.totalorder %s114, %s115
      %p124 = scmp.eq.s32.totalorder %s20, 0
      %p125 = por %p123, %p124
      %p126 = scmp.ne.s32.totalorder %s114, %s115
      %p127 = scmp.eq.s32.totalorder %s21, 3
      %p128 = por %p126, %p127
      %p130 = scmp.ne.s32.totalorder %s115, %s129
      %p131 = scmp.eq.s32.totalorder %s21, 0
      %p132 = por %p130, %p131
      %s133 = ssub.s32 %s22, %s34
      %p134 = scmp.eq.s32.totalorder %s133, 0
      %s136 = sadd.s32 %s135, 1
      %s137 = scalar_select %p134, %s135, %s136
      %p140 = pneg %p134
      %p141 = scmp.eq.s32.totalorder %s15, 3
      %p142 = por %p140, %p141
      %p143 = scmp.ne.s32.totalorder %s135, %s138
      %p144 = scmp.eq.s32.totalorder %s15, 0
      %p145 = por %p143, %p144
      %p146 = scmp.ne.s32.totalorder %s135, %s138
      %p147 = scmp.eq.s32.totalorder %s20, 3
      %p148 = por %p146, %p147
      %p149 = scmp.ne.s32.totalorder %s138, %s139
      %p150 = scmp.eq.s32.totalorder %s20, 0
      %p151 = por %p149, %p150
      %p152 = scmp.ne.s32.totalorder %s138, %s139
      %p153 = scmp.eq.s32.totalorder %s21, 3
      %p154 = por %p152, %p153
      %p156 = scmp.ne.s32.totalorder %s139, %s155
      %p157 = scmp.eq.s32.totalorder %s21, 0
      %p158 = por %p156, %p157
      %s159 = ssub.s32 %s22, %s34
      %p160 = scmp.eq.s32.totalorder %s159, 0
      %s162 = sadd.s32 %s161, 1
      %s163 = scalar_select %p160, %s161, %s162
      %p166 = pneg %p160
      %p167 = scmp.eq.s32.totalorder %s15, 3
      %p168 = por %p166, %p167
      %p169 = scmp.ne.s32.totalorder %s161, %s164
      %p170 = scmp.eq.s32.totalorder %s15, 0
      %p171 = por %p169, %p170
      %p172 = scmp.ne.s32.totalorder %s161, %s164
      %p173 = scmp.eq.s32.totalorder %s20, 3
      %p174 = por %p172, %p173
      %p175 = scmp.ne.s32.totalorder %s164, %s165
      %p176 = scmp.eq.s32.totalorder %s20, 0
      %p177 = por %p175, %p176
      %p178 = scmp.ne.s32.totalorder %s164, %s165
      %p179 = scmp.eq.s32.totalorder %s21, 3
      %p180 = por %p178, %p179
      %p182 = scmp.ne.s32.totalorder %s165, %s181
      %p183 = scmp.eq.s32.totalorder %s21, 0
      %p184 = por %p182, %p183
      %s185 = ssub.s32 %s22, %s34
      %p186 = scmp.eq.s32.totalorder %s185, 0
      %s188 = sadd.s32 %s187, 1
      %s189 = scalar_select %p186, %s187, %s188
      %p192 = pneg %p186
      %p193 = scmp.eq.s32.totalorder %s15, 3
      %p194 = por %p192, %p193
      %p195 = scmp.ne.s32.totalorder %s187, %s190
      %p196 = scmp.eq.s32.totalorder %s15, 0
      %p197 = por %p195, %p196
      %p198 = scmp.ne.s32.totalorder %s187, %s190
      %p199 = scmp.eq.s32.totalorder %s20, 3
      %p200 = por %p198, %p199
      %p201 = scmp.ne.s32.totalorder %s190, %s191
      %p202 = scmp.eq.s32.totalorder %s20, 0
      %p203 = por %p201, %p202
      %p204 = scmp.ne.s32.totalorder %s190, %s191
      %p205 = scmp.eq.s32.totalorder %s21, 3
      %p206 = por %p204, %p205
      %p208 = scmp.ne.s32.totalorder %s191, %s207
      %p209 = scmp.eq.s32.totalorder %s21, 0
      %p210 = por %p208, %p209
      %p211 = scmp.le.s32.totalorder 1, %s15
      %p212 = scmp.lt.s32.totalorder %s15, 5
      %p213 = pnand %p211, %p212
      %p214 = pneg %p213
      // Predicated region
      $region9: #{tpu_custom_call.1} parent=5 // pred_check
        _
      $region10: #{tpu_custom_call.1} parent=5 // pred_check_branch
        %216 = sbr.rel (%p213) target = $region12
      $region11: #{tpu_custom_call.1} parent=5 // pred_region
        %s217 = ssub.s32 %s15, 1
        // Predicated region
        $region13: #{tpu_custom_call.1} parent=11 // pred_check
          %p218 = pneg %p104
        $region14: #{tpu_custom_call.1} parent=11 // pred_check_branch
          %220 = sbr.rel (%p218) target = $region16
        $region15: #{tpu_custom_call.1} parent=11 // pred_region
          _
        $region16: #{tpu_custom_call.1} parent=11 // pred_fallthru
          _
        // Predicated region
        $region17: #{tpu_custom_call.1} parent=11 // pred_check
          %p221 = pneg %p125
        $region18: #{tpu_custom_call.1} parent=11 // pred_check_branch
          %223 = sbr.rel (%p221) target = $region20
        $region19: #{tpu_custom_call.1} parent=11 // pred_region
          _
        $region20: #{tpu_custom_call.1} parent=11 // pred_fallthru
          _
      $region12: #{tpu_custom_call.1} parent=5 // pred_fallthru
        _
      %p224 = scmp.lt.s32.totalorder %s15, 4
      // Predicated region
      $region21: #{tpu_custom_call.1} parent=5 // pred_check
        %p225 = pneg %p224
      $region22: #{tpu_custom_call.1} parent=5 // pred_check_branch
        %227 = sbr.rel (%p225) target = $region24
      $region23: #{tpu_custom_call.1} parent=5 // pred_region
        // Predicated region
        $region25: #{tpu_custom_call.1} parent=23 // pred_check
          %p228 = pneg %p49
        $region26: #{tpu_custom_call.1} parent=23 // pred_check_branch
          %230 = sbr.rel (%p228) target = $region28
        $region27: #{tpu_custom_call.1} parent=23 // pred_region
          %s231 = sand.u32 %s39, 1
          %s232 = sand.u32 %s39, 1
          %s233 = smul.addr %s232, 8
          %s234 = scalar_lea.vmem [#allocation3], %s233
          %s235 = smul.u32 8, %s22
          %s236 = smul.addr %s235, 2
          %s237 = sadd.s32 %s23, %s236
          %s238 = scalar_lea.vmem %s0, %s237
          // Predicated region
          $region29: #{tpu_custom_call.1} parent=27 // pred_check
            _
          $region30: #{tpu_custom_call.1} parent=27 // pred_check_branch
            %240 = sbr.rel (0) target = $region32
          $region31: #{tpu_custom_call.1} parent=27 // pred_region
            // Predicated region
            $region33: #{tpu_custom_call.1} parent=31 // pred_check
              _
            $region34: #{tpu_custom_call.1} parent=31 // pred_check_branch
              %242 = sbr.rel target = $region36
            $region35: #{tpu_custom_call.1} parent=31 // pred_region
              // Predicated region
              $region48: #{tpu_custom_call.1} parent=35 // pred_check
                _
              $region49: #{tpu_custom_call.1} parent=35 // pred_check_branch
                %272 = sbr.rel (0) target = $region51
              $region50: #{tpu_custom_call.1} parent=35 // pred_region
                loop: start=0, step=1, limit=1
                $region52: #{tpu_custom_call.1} parent=50 // loop_pre_header
                  _
                $region53: #{tpu_custom_call.1} parent=50 // loop_header
                  %s274 = sphi 0, %s278
                  %p275 = scmp.ge.s32.totalorder %s274, 1
                  %s279 = sphi %s238, %s238
                  %s280 = sphi %s234, %s234
                $region54: #{tpu_custom_call.1} parent=50 // loop_header_branch
                  %277 = sbr.rel (%p275) target = $region58
                $region55: #{tpu_custom_call.1} parent=50 // loop_body
                  _
                $region56: #{tpu_custom_call.1} parent=50 // loop_footer
                  %s278 = sadd.s32 1, %s274
                $region57: #{tpu_custom_call.1} parent=50 // loop_footer_branch
                  %273 = sbr.rel target = $region53
                $region58: #{tpu_custom_call.1} parent=50 // loop_exit
                  _
                %s282 = ssub.s32 2, 1
                loop: start=0, step=1, limit=1
                $region59: #{tpu_custom_call.1} parent=50 // loop_pre_header
                  _
                $region60: #{tpu_custom_call.1} parent=50 // loop_header
                  %s284 = sphi 0, %s288
                  %p285 = scmp.ge.s32.totalorder %s284, 1
                  %s289 = sphi %s238, %s238
                  %s290 = sphi %s234, %s234
                $region61: #{tpu_custom_call.1} parent=50 // loop_header_branch
                  %287 = sbr.rel (%p285) target = $region65
                $region62: #{tpu_custom_call.1} parent=50 // loop_body
                  %v291 = vld [vmem:[%s289] sm:%s282]
                  %292 = vst [vmem:[%s290] sm:%s282] %v291
                  %v293 = vld [vmem:[%s289 + $0x2] sm:%s282]
                  %294 = vst [vmem:[%s290 + $0x1] sm:%s282] %v293
                  %v295 = vld [vmem:[%s289 + $0x4] sm:%s282]
                  %296 = vst [vmem:[%s290 + $0x2] sm:%s282] %v295
                  %v297 = vld [vmem:[%s289 + $0x6] sm:%s282]
                  %298 = vst [vmem:[%s290 + $0x3] sm:%s282] %v297
                  %v299 = vld [vmem:[%s289 + $0x8] sm:%s282]
                  %300 = vst [vmem:[%s290 + $0x4] sm:%s282] %v299
                  %v301 = vld [vmem:[%s289 + $0xa] sm:%s282]
                  %302 = vst [vmem:[%s290 + $0x5] sm:%s282] %v301
                  %v303 = vld [vmem:[%s289 + $0xc] sm:%s282]
                  %304 = vst [vmem:[%s290 + $0x6] sm:%s282] %v303
                  %v305 = vld [vmem:[%s289 + $0xe] sm:%s282]
                  %306 = vst [vmem:[%s290 + $0x7] sm:%s282] %v305
                $region63: #{tpu_custom_call.1} parent=50 // loop_footer
                  %s288 = sadd.s32 1, %s284
                $region64: #{tpu_custom_call.1} parent=50 // loop_footer_branch
                  %283 = sbr.rel target = $region60
                $region65: #{tpu_custom_call.1} parent=50 // loop_exit
                  _
              $region51: #{tpu_custom_call.1} parent=35 // pred_fallthru
                _
            $region36: #{tpu_custom_call.1} parent=31 // pred_fallthru
              _
            // Predicated region
            $region37: #{tpu_custom_call.1} parent=31 // pred_check
              _
            $region38: #{tpu_custom_call.1} parent=31 // pred_check_branch
              %244 = sbr.rel (0) target = $region40
            $region39: #{tpu_custom_call.1} parent=31 // pred_region
              %s246 = ssub.s32 2, 1
              loop: start=0, step=1, limit=1
              $region41: #{tpu_custom_call.1} parent=39 // loop_pre_header
                _
              $region42: #{tpu_custom_call.1} parent=39 // loop_header
                %s248 = sphi 0, %s252
                %p249 = scmp.ge.s32.totalorder %s248, 1
                %s253 = sphi %s238, %s238
                %s254 = sphi %s234, %s234
              $region43: #{tpu_custom_call.1} parent=39 // loop_header_branch
                %251 = sbr.rel (%p249) target = $region47
              $region44: #{tpu_custom_call.1} parent=39 // loop_body
                %v255 = vld [vmem:[%s253] sm:%s246]
                %256 = vst [vmem:[%s254] sm:%s246] %v255
                %v257 = vld [vmem:[%s253 + $0x2] sm:%s246]
                %258 = vst [vmem:[%s254 + $0x1] sm:%s246] %v257
                %v259 = vld [vmem:[%s253 + $0x4] sm:%s246]
                %260 = vst [vmem:[%s254 + $0x2] sm:%s246] %v259
                %v261 = vld [vmem:[%s253 + $0x6] sm:%s246]
                %262 = vst [vmem:[%s254 + $0x3] sm:%s246] %v261
                %v263 = vld [vmem:[%s253 + $0x8] sm:%s246]
                %264 = vst [vmem:[%s254 + $0x4] sm:%s246] %v263
                %v265 = vld [vmem:[%s253 + $0xa] sm:%s246]
                %266 = vst [vmem:[%s254 + $0x5] sm:%s246] %v265
                %v267 = vld [vmem:[%s253 + $0xc] sm:%s246]
                %268 = vst [vmem:[%s254 + $0x6] sm:%s246] %v267
                %v269 = vld [vmem:[%s253 + $0xe] sm:%s246]
                %270 = vst [vmem:[%s254 + $0x7] sm:%s246] %v269
              $region45: #{tpu_custom_call.1} parent=39 // loop_footer
                %s252 = sadd.s32 1, %s248
              $region46: #{tpu_custom_call.1} parent=39 // loop_footer_branch
                %247 = sbr.rel target = $region42
              $region47: #{tpu_custom_call.1} parent=39 // loop_exit
                _
            $region40: #{tpu_custom_call.1} parent=31 // pred_fallthru
              _
          $region32: #{tpu_custom_call.1} parent=27 // pred_fallthru
            _
          %307 = vnop
        $region28: #{tpu_custom_call.1} parent=23 // pred_fallthru
          _
        // Predicated region
        $region66: #{tpu_custom_call.1} parent=23 // pred_check
          %p308 = pneg %p77
        $region67: #{tpu_custom_call.1} parent=23 // pred_check_branch
          %310 = sbr.rel (%p308) target = $region69
        $region68: #{tpu_custom_call.1} parent=23 // pred_region
          %s311 = sand.u32 %s67, 1
          %s312 = sand.u32 %s67, 1
          %s313 = smul.addr %s312, 1024
          %s314 = scalar_lea.vmem [#allocation4], %s313
          %s315 = smul.u32 8, %s22
          %s316 = smul.u32 16, %s23
          %s317 = smul.addr %s315, 32
          %s318 = sadd.s32 %s316, %s317
          %s319 = smul.addr %s318, 8
          %s320 = scalar_lea.vmem %s1, %s319
          // Predicated region
          $region70: #{tpu_custom_call.1} parent=68 // pred_check
            _
          $region71: #{tpu_custom_call.1} parent=68 // pred_check_branch
            %322 = sbr.rel (0) target = $region73
          $region72: #{tpu_custom_call.1} parent=68 // pred_region
            // Predicated region
            $region74: #{tpu_custom_call.1} parent=72 // pred_check
              _
            $region75: #{tpu_custom_call.1} parent=72 // pred_check_branch
              %324 = sbr.rel (0) target = $region77
            $region76: #{tpu_custom_call.1} parent=72 // pred_region
              // Predicated region
              $region89: #{tpu_custom_call.1} parent=76 // pred_check
                _
              $region90: #{tpu_custom_call.1} parent=76 // pred_check_branch
                %594 = sbr.rel (0) target = $region92
              $region91: #{tpu_custom_call.1} parent=76 // pred_region
                loop: start=0, step=1, limit=1
                $region93: #{tpu_custom_call.1} parent=91 // loop_pre_header
                  _
                $region94: #{tpu_custom_call.1} parent=91 // loop_header
                  %s596 = sphi 0, %s600
                  %p597 = scmp.ge.s32.totalorder %s596, 1
                  %s601 = sphi %s320, %s320
                  %s602 = sphi %s314, %s314
                $region95: #{tpu_custom_call.1} parent=91 // loop_header_branch
                  %599 = sbr.rel (%p597) target = $region99
                $region96: #{tpu_custom_call.1} parent=91 // loop_body
                  %v603 = vld [vmem:[%s601] sm:$0xff]
                  %604 = vst [vmem:[%s602] sm:$0xff] %v603
                  %v605 = vld [vmem:[%s601 + $0x8] sm:$0xff]
                  %606 = vst [vmem:[%s602 + $0x8] sm:$0xff] %v605
                  %v607 = vld [vmem:[%s601 + $0x10] sm:$0xff]
                  %608 = vst [vmem:[%s602 + $0x10] sm:$0xff] %v607
                  %v609 = vld [vmem:[%s601 + $0x18] sm:$0xff]
                  %610 = vst [vmem:[%s602 + $0x18] sm:$0xff] %v609
                  %v611 = vld [vmem:[%s601 + $0x20] sm:$0xff]
                  %612 = vst [vmem:[%s602 + $0x20] sm:$0xff] %v611
                  %v613 = vld [vmem:[%s601 + $0x28] sm:$0xff]
                  %614 = vst [vmem:[%s602 + $0x28] sm:$0xff] %v613
                  %v615 = vld [vmem:[%s601 + $0x30] sm:$0xff]
                  %616 = vst [vmem:[%s602 + $0x30] sm:$0xff] %v615
                  %v617 = vld [vmem:[%s601 + $0x38] sm:$0xff]
                  %618 = vst [vmem:[%s602 + $0x38] sm:$0xff] %v617
                  %v619 = vld [vmem:[%s601 + $0x40] sm:$0xff]
                  %620 = vst [vmem:[%s602 + $0x40] sm:$0xff] %v619
                  %v621 = vld [vmem:[%s601 + $0x48] sm:$0xff]
                  %622 = vst [vmem:[%s602 + $0x48] sm:$0xff] %v621
                  %v623 = vld [vmem:[%s601 + $0x50] sm:$0xff]
                  %624 = vst [vmem:[%s602 + $0x50] sm:$0xff] %v623
                  %v625 = vld [vmem:[%s601 + $0x58] sm:$0xff]
                  %626 = vst [vmem:[%s602 + $0x58] sm:$0xff] %v625
                  %v627 = vld [vmem:[%s601 + $0x60] sm:$0xff]
                  %628 = vst [vmem:[%s602 + $0x60] sm:$0xff] %v627
                  %v629 = vld [vmem:[%s601 + $0x68] sm:$0xff]
                  %630 = vst [vmem:[%s602 + $0x68] sm:$0xff] %v629
                  %v631 = vld [vmem:[%s601 + $0x70] sm:$0xff]
                  %632 = vst [vmem:[%s602 + $0x70] sm:$0xff] %v631
                  %v633 = vld [vmem:[%s601 + $0x78] sm:$0xff]
                  %634 = vst [vmem:[%s602 + $0x78] sm:$0xff] %v633
                  %v635 = vld [vmem:[%s601 + $0x100] sm:$0xff]
                  %636 = vst [vmem:[%s602 + $0x80] sm:$0xff] %v635
                  %v637 = vld [vmem:[%s601 + $0x108] sm:$0xff]
                  %638 = vst [vmem:[%s602 + $0x88] sm:$0xff] %v637
                  %v639 = vld [vmem:[%s601 + $0x110] sm:$0xff]
                  %640 = vst [vmem:[%s602 + $0x90] sm:$0xff] %v639
                  %v641 = vld [vmem:[%s601 + $0x118] sm:$0xff]
                  %642 = vst [vmem:[%s602 + $0x98] sm:$0xff] %v641
                  %v643 = vld [vmem:[%s601 + $0x120] sm:$0xff]
                  %644 = vst [vmem:[%s602 + $0xa0] sm:$0xff] %v643
                  %v645 = vld [vmem:[%s601 + $0x128] sm:$0xff]
                  %646 = vst [vmem:[%s602 + $0xa8] sm:$0xff] %v645
                  %v647 = vld [vmem:[%s601 + $0x130] sm:$0xff]
                  %648 = vst [vmem:[%s602 + $0xb0] sm:$0xff] %v647
                  %v649 = vld [vmem:[%s601 + $0x138] sm:$0xff]
                  %650 = vst [vmem:[%s602 + $0xb8] sm:$0xff] %v649
                  %v651 = vld [vmem:[%s601 + $0x140] sm:$0xff]
                  %652 = vst [vmem:[%s602 + $0xc0] sm:$0xff] %v651
                  %v653 = vld [vmem:[%s601 + $0x148] sm:$0xff]
                  %654 = vst [vmem:[%s602 + $0xc8] sm:$0xff] %v653
                  %v655 = vld [vmem:[%s601 + $0x150] sm:$0xff]
                  %656 = vst [vmem:[%s602 + $0xd0] sm:$0xff] %v655
                  %v657 = vld [vmem:[%s601 + $0x158] sm:$0xff]
                  %658 = vst [vmem:[%s602 + $0xd8] sm:$0xff] %v657
                  %v659 = vld [vmem:[%s601 + $0x160] sm:$0xff]
                  %660 = vst [vmem:[%s602 + $0xe0] sm:$0xff] %v659
                  %v661 = vld [vmem:[%s601 + $0x168] sm:$0xff]
                  %662 = vst [vmem:[%s602 + $0xe8] sm:$0xff] %v661
                  %v663 = vld [vmem:[%s601 + $0x170] sm:$0xff]
                  %664 = vst [vmem:[%s602 + $0xf0] sm:$0xff] %v663
                  %v665 = vld [vmem:[%s601 + $0x178] sm:$0xff]
                  %666 = vst [vmem:[%s602 + $0xf8] sm:$0xff] %v665
                  %v667 = vld [vmem:[%s601 + $0x200] sm:$0xff]
                  %668 = vst [vmem:[%s602 + $0x100] sm:$0xff] %v667
                  %v669 = vld [vmem:[%s601 + $0x208] sm:$0xff]
                  %670 = vst [vmem:[%s602 + $0x108] sm:$0xff] %v669
                  %v671 = vld [vmem:[%s601 + $0x210] sm:$0xff]
                  %672 = vst [vmem:[%s602 + $0x110] sm:$0xff] %v671
                  %v673 = vld [vmem:[%s601 + $0x218] sm:$0xff]
                  %674 = vst [vmem:[%s602 + $0x118] sm:$0xff] %v673
                  %v675 = vld [vmem:[%s601 + $0x220] sm:$0xff]
                  %676 = vst [vmem:[%s602 + $0x120] sm:$0xff] %v675
                  %v677 = vld [vmem:[%s601 + $0x228] sm:$0xff]
                  %678 = vst [vmem:[%s602 + $0x128] sm:$0xff] %v677
                  %v679 = vld [vmem:[%s601 + $0x230] sm:$0xff]
                  %680 = vst [vmem:[%s602 + $0x130] sm:$0xff] %v679
                  %v681 = vld [vmem:[%s601 + $0x238] sm:$0xff]
                  %682 = vst [vmem:[%s602 + $0x138] sm:$0xff] %v681
                  %v683 = vld [vmem:[%s601 + $0x240] sm:$0xff]
                  %684 = vst [vmem:[%s602 + $0x140] sm:$0xff] %v683
                  %v685 = vld [vmem:[%s601 + $0x248] sm:$0xff]
                  %686 = vst [vmem:[%s602 + $0x148] sm:$0xff] %v685
                  %v687 = vld [vmem:[%s601 + $0x250] sm:$0xff]
                  %688 = vst [vmem:[%s602 + $0x150] sm:$0xff] %v687
                  %v689 = vld [vmem:[%s601 + $0x258] sm:$0xff]
                  %690 = vst [vmem:[%s602 + $0x158] sm:$0xff] %v689
                  %v691 = vld [vmem:[%s601 + $0x260] sm:$0xff]
                  %692 = vst [vmem:[%s602 + $0x160] sm:$0xff] %v691
                  %v693 = vld [vmem:[%s601 + $0x268] sm:$0xff]
                  %694 = vst [vmem:[%s602 + $0x168] sm:$0xff] %v693
                  %v695 = vld [vmem:[%s601 + $0x270] sm:$0xff]
                  %696 = vst [vmem:[%s602 + $0x170] sm:$0xff] %v695
                  %v697 = vld [vmem:[%s601 + $0x278] sm:$0xff]
                  %698 = vst [vmem:[%s602 + $0x178] sm:$0xff] %v697
                  %v699 = vld [vmem:[%s601 + $0x300] sm:$0xff]
                  %700 = vst [vmem:[%s602 + $0x180] sm:$0xff] %v699
                  %v701 = vld [vmem:[%s601 + $0x308] sm:$0xff]
                  %702 = vst [vmem:[%s602 + $0x188] sm:$0xff] %v701
                  %v703 = vld [vmem:[%s601 + $0x310] sm:$0xff]
                  %704 = vst [vmem:[%s602 + $0x190] sm:$0xff] %v703
                  %v705 = vld [vmem:[%s601 + $0x318] sm:$0xff]
                  %706 = vst [vmem:[%s602 + $0x198] sm:$0xff] %v705
                  %v707 = vld [vmem:[%s601 + $0x320] sm:$0xff]
                  %708 = vst [vmem:[%s602 + $0x1a0] sm:$0xff] %v707
                  %v709 = vld [vmem:[%s601 + $0x328] sm:$0xff]
                  %710 = vst [vmem:[%s602 + $0x1a8] sm:$0xff] %v709
                  %v711 = vld [vmem:[%s601 + $0x330] sm:$0xff]
                  %712 = vst [vmem:[%s602 + $0x1b0] sm:$0xff] %v711
                  %v713 = vld [vmem:[%s601 + $0x338] sm:$0xff]
                  %714 = vst [vmem:[%s602 + $0x1b8] sm:$0xff] %v713
                  %v715 = vld [vmem:[%s601 + $0x340] sm:$0xff]
                  %716 = vst [vmem:[%s602 + $0x1c0] sm:$0xff] %v715
                  %v717 = vld [vmem:[%s601 + $0x348] sm:$0xff]
                  %718 = vst [vmem:[%s602 + $0x1c8] sm:$0xff] %v717
                  %v719 = vld [vmem:[%s601 + $0x350] sm:$0xff]
                  %720 = vst [vmem:[%s602 + $0x1d0] sm:$0xff] %v719
                  %v721 = vld [vmem:[%s601 + $0x358] sm:$0xff]
                  %722 = vst [vmem:[%s602 + $0x1d8] sm:$0xff] %v721
                  %v723 = vld [vmem:[%s601 + $0x360] sm:$0xff]
                  %724 = vst [vmem:[%s602 + $0x1e0] sm:$0xff] %v723
                  %v725 = vld [vmem:[%s601 + $0x368] sm:$0xff]
                  %726 = vst [vmem:[%s602 + $0x1e8] sm:$0xff] %v725
                  %v727 = vld [vmem:[%s601 + $0x370] sm:$0xff]
                  %728 = vst [vmem:[%s602 + $0x1f0] sm:$0xff] %v727
                  %v729 = vld [vmem:[%s601 + $0x378] sm:$0xff]
                  %730 = vst [vmem:[%s602 + $0x1f8] sm:$0xff] %v729
                  %v731 = vld [vmem:[%s601 + $0x400] sm:$0xff]
                  %732 = vst [vmem:[%s602 + $0x200] sm:$0xff] %v731
                  %v733 = vld [vmem:[%s601 + $0x408] sm:$0xff]
                  %734 = vst [vmem:[%s602 + $0x208] sm:$0xff] %v733
                  %v735 = vld [vmem:[%s601 + $0x410] sm:$0xff]
                  %736 = vst [vmem:[%s602 + $0x210] sm:$0xff] %v735
                  %v737 = vld [vmem:[%s601 + $0x418] sm:$0xff]
                  %738 = vst [vmem:[%s602 + $0x218] sm:$0xff] %v737
                  %v739 = vld [vmem:[%s601 + $0x420] sm:$0xff]
                  %740 = vst [vmem:[%s602 + $0x220] sm:$0xff] %v739
                  %v741 = vld [vmem:[%s601 + $0x428] sm:$0xff]
                  %742 = vst [vmem:[%s602 + $0x228] sm:$0xff] %v741
                  %v743 = vld [vmem:[%s601 + $0x430] sm:$0xff]
                  %744 = vst [vmem:[%s602 + $0x230] sm:$0xff] %v743
                  %v745 = vld [vmem:[%s601 + $0x438] sm:$0xff]
                  %746 = vst [vmem:[%s602 + $0x238] sm:$0xff] %v745
                  %v747 = vld [vmem:[%s601 + $0x440] sm:$0xff]
                  %748 = vst [vmem:[%s602 + $0x240] sm:$0xff] %v747
                  %v749 = vld [vmem:[%s601 + $0x448] sm:$0xff]
                  %750 = vst [vmem:[%s602 + $0x248] sm:$0xff] %v749
                  %v751 = vld [vmem:[%s601 + $0x450] sm:$0xff]
                  %752 = vst [vmem:[%s602 + $0x250] sm:$0xff] %v751
                  %v753 = vld [vmem:[%s601 + $0x458] sm:$0xff]
                  %754 = vst [vmem:[%s602 + $0x258] sm:$0xff] %v753
                  %v755 = vld [vmem:[%s601 + $0x460] sm:$0xff]
                  %756 = vst [vmem:[%s602 + $0x260] sm:$0xff] %v755
                  %v757 = vld [vmem:[%s601 + $0x468] sm:$0xff]
                  %758 = vst [vmem:[%s602 + $0x268] sm:$0xff] %v757
                  %v759 = vld [vmem:[%s601 + $0x470] sm:$0xff]
                  %760 = vst [vmem:[%s602 + $0x270] sm:$0xff] %v759
                  %v761 = vld [vmem:[%s601 + $0x478] sm:$0xff]
                  %762 = vst [vmem:[%s602 + $0x278] sm:$0xff] %v761
                  %v763 = vld [vmem:[%s601 + $0x500] sm:$0xff]
                  %764 = vst [vmem:[%s602 + $0x280] sm:$0xff] %v763
                  %v765 = vld [vmem:[%s601 + $0x508] sm:$0xff]
                  %766 = vst [vmem:[%s602 + $0x288] sm:$0xff] %v765
                  %v767 = vld [vmem:[%s601 + $0x510] sm:$0xff]
                  %768 = vst [vmem:[%s602 + $0x290] sm:$0xff] %v767
                  %v769 = vld [vmem:[%s601 + $0x518] sm:$0xff]
                  %770 = vst [vmem:[%s602 + $0x298] sm:$0xff] %v769
                  %v771 = vld [vmem:[%s601 + $0x520] sm:$0xff]
                  %772 = vst [vmem:[%s602 + $0x2a0] sm:$0xff] %v771
                  %v773 = vld [vmem:[%s601 + $0x528] sm:$0xff]
                  %774 = vst [vmem:[%s602 + $0x2a8] sm:$0xff] %v773
                  %v775 = vld [vmem:[%s601 + $0x530] sm:$0xff]
                  %776 = vst [vmem:[%s602 + $0x2b0] sm:$0xff] %v775
                  %v777 = vld [vmem:[%s601 + $0x538] sm:$0xff]
                  %778 = vst [vmem:[%s602 + $0x2b8] sm:$0xff] %v777
                  %v779 = vld [vmem:[%s601 + $0x540] sm:$0xff]
                  %780 = vst [vmem:[%s602 + $0x2c0] sm:$0xff] %v779
                  %v781 = vld [vmem:[%s601 + $0x548] sm:$0xff]
                  %782 = vst [vmem:[%s602 + $0x2c8] sm:$0xff] %v781
                  %v783 = vld [vmem:[%s601 + $0x550] sm:$0xff]
                  %784 = vst [vmem:[%s602 + $0x2d0] sm:$0xff] %v783
                  %v785 = vld [vmem:[%s601 + $0x558] sm:$0xff]
                  %786 = vst [vmem:[%s602 + $0x2d8] sm:$0xff] %v785
                  %v787 = vld [vmem:[%s601 + $0x560] sm:$0xff]
                  %788 = vst [vmem:[%s602 + $0x2e0] sm:$0xff] %v787
                  %v789 = vld [vmem:[%s601 + $0x568] sm:$0xff]
                  %790 = vst [vmem:[%s602 + $0x2e8] sm:$0xff] %v789
                  %v791 = vld [vmem:[%s601 + $0x570] sm:$0xff]
                  %792 = vst [vmem:[%s602 + $0x2f0] sm:$0xff] %v791
                  %v793 = vld [vmem:[%s601 + $0x578] sm:$0xff]
                  %794 = vst [vmem:[%s602 + $0x2f8] sm:$0xff] %v793
                  %v795 = vld [vmem:[%s601 + $0x600] sm:$0xff]
                  %796 = vst [vmem:[%s602 + $0x300] sm:$0xff] %v795
                  %v797 = vld [vmem:[%s601 + $0x608] sm:$0xff]
                  %798 = vst [vmem:[%s602 + $0x308] sm:$0xff] %v797
                  %v799 = vld [vmem:[%s601 + $0x610] sm:$0xff]
                  %800 = vst [vmem:[%s602 + $0x310] sm:$0xff] %v799
                  %v801 = vld [vmem:[%s601 + $0x618] sm:$0xff]
                  %802 = vst [vmem:[%s602 + $0x318] sm:$0xff] %v801
                  %v803 = vld [vmem:[%s601 + $0x620] sm:$0xff]
                  %804 = vst [vmem:[%s602 + $0x320] sm:$0xff] %v803
                  %v805 = vld [vmem:[%s601 + $0x628] sm:$0xff]
                  %806 = vst [vmem:[%s602 + $0x328] sm:$0xff] %v805
                  %v807 = vld [vmem:[%s601 + $0x630] sm:$0xff]
                  %808 = vst [vmem:[%s602 + $0x330] sm:$0xff] %v807
                  %v809 = vld [vmem:[%s601 + $0x638] sm:$0xff]
                  %810 = vst [vmem:[%s602 + $0x338] sm:$0xff] %v809
                  %v811 = vld [vmem:[%s601 + $0x640] sm:$0xff]
                  %812 = vst [vmem:[%s602 + $0x340] sm:$0xff] %v811
                  %v813 = vld [vmem:[%s601 + $0x648] sm:$0xff]
                  %814 = vst [vmem:[%s602 + $0x348] sm:$0xff] %v813
                  %v815 = vld [vmem:[%s601 + $0x650] sm:$0xff]
                  %816 = vst [vmem:[%s602 + $0x350] sm:$0xff] %v815
                  %v817 = vld [vmem:[%s601 + $0x658] sm:$0xff]
                  %818 = vst [vmem:[%s602 + $0x358] sm:$0xff] %v817
                  %v819 = vld [vmem:[%s601 + $0x660] sm:$0xff]
                  %820 = vst [vmem:[%s602 + $0x360] sm:$0xff] %v819
                  %v821 = vld [vmem:[%s601 + $0x668] sm:$0xff]
                  %822 = vst [vmem:[%s602 + $0x368] sm:$0xff] %v821
                  %v823 = vld [vmem:[%s601 + $0x670] sm:$0xff]
                  %824 = vst [vmem:[%s602 + $0x370] sm:$0xff] %v823
                  %v825 = vld [vmem:[%s601 + $0x678] sm:$0xff]
                  %826 = vst [vmem:[%s602 + $0x378] sm:$0xff] %v825
                  %v827 = vld [vmem:[%s601 + $0x700] sm:$0xff]
                  %828 = vst [vmem:[%s602 + $0x380] sm:$0xff] %v827
                  %v829 = vld [vmem:[%s601 + $0x708] sm:$0xff]
                  %830 = vst [vmem:[%s602 + $0x388] sm:$0xff] %v829
                  %v831 = vld [vmem:[%s601 + $0x710] sm:$0xff]
                  %832 = vst [vmem:[%s602 + $0x390] sm:$0xff] %v831
                  %v833 = vld [vmem:[%s601 + $0x718] sm:$0xff]
                  %834 = vst [vmem:[%s602 + $0x398] sm:$0xff] %v833
                  %v835 = vld [vmem:[%s601 + $0x720] sm:$0xff]
                  %836 = vst [vmem:[%s602 + $0x3a0] sm:$0xff] %v835
                  %v837 = vld [vmem:[%s601 + $0x728] sm:$0xff]
                  %838 = vst [vmem:[%s602 + $0x3a8] sm:$0xff] %v837
                  %v839 = vld [vmem:[%s601 + $0x730] sm:$0xff]
                  %840 = vst [vmem:[%s602 + $0x3b0] sm:$0xff] %v839
                  %v841 = vld [vmem:[%s601 + $0x738] sm:$0xff]
                  %842 = vst [vmem:[%s602 + $0x3b8] sm:$0xff] %v841
                  %v843 = vld [vmem:[%s601 + $0x740] sm:$0xff]
                  %844 = vst [vmem:[%s602 + $0x3c0] sm:$0xff] %v843
                  %v845 = vld [vmem:[%s601 + $0x748] sm:$0xff]
                  %846 = vst [vmem:[%s602 + $0x3c8] sm:$0xff] %v845
                  %v847 = vld [vmem:[%s601 + $0x750] sm:$0xff]
                  %848 = vst [vmem:[%s602 + $0x3d0] sm:$0xff] %v847
                  %v849 = vld [vmem:[%s601 + $0x758] sm:$0xff]
                  %850 = vst [vmem:[%s602 + $0x3d8] sm:$0xff] %v849
                  %v851 = vld [vmem:[%s601 + $0x760] sm:$0xff]
                  %852 = vst [vmem:[%s602 + $0x3e0] sm:$0xff] %v851
                  %v853 = vld [vmem:[%s601 + $0x768] sm:$0xff]
                  %854 = vst [vmem:[%s602 + $0x3e8] sm:$0xff] %v853
                  %v855 = vld [vmem:[%s601 + $0x770] sm:$0xff]
                  %856 = vst [vmem:[%s602 + $0x3f0] sm:$0xff] %v855
                  %v857 = vld [vmem:[%s601 + $0x778] sm:$0xff]
                  %858 = vst [vmem:[%s602 + $0x3f8] sm:$0xff] %v857
                $region97: #{tpu_custom_call.1} parent=91 // loop_footer
                  %s600 = sadd.s32 1, %s596
                $region98: #{tpu_custom_call.1} parent=91 // loop_footer_branch
                  %595 = sbr.rel target = $region94
                $region99: #{tpu_custom_call.1} parent=91 // loop_exit
                  _
              $region92: #{tpu_custom_call.1} parent=76 // pred_fallthru
                _
              // Predicated region
              $region100: #{tpu_custom_call.1} parent=76 // pred_check
                _
              $region101: #{tpu_custom_call.1} parent=76 // pred_check_branch
                %860 = sbr.rel target = $region103
              $region102: #{tpu_custom_call.1} parent=76 // pred_region
                _
              $region103: #{tpu_custom_call.1} parent=76 // pred_fallthru
                _
            $region77: #{tpu_custom_call.1} parent=72 // pred_fallthru
              _
            // Predicated region
            $region78: #{tpu_custom_call.1} parent=72 // pred_check
              _
            $region79: #{tpu_custom_call.1} parent=72 // pred_check_branch
              %326 = sbr.rel target = $region81
            $region80: #{tpu_custom_call.1} parent=72 // pred_region
              %s328 = ssub.s32 256, 1
              loop: start=0, step=1, limit=1
              $region82: #{tpu_custom_call.1} parent=80 // loop_pre_header
                _
              $region83: #{tpu_custom_call.1} parent=80 // loop_header
                %s330 = sphi 0, %s334
                %p331 = scmp.ge.s32.totalorder %s330, 1
                %s335 = sphi %s320, %s320
                %s336 = sphi %s314, %s314
              $region84: #{tpu_custom_call.1} parent=80 // loop_header_branch
                %333 = sbr.rel (%p331) target = $region88
              $region85: #{tpu_custom_call.1} parent=80 // loop_body
                %v337 = vld [vmem:[%s335] sm:%s328]
                %338 = vst [vmem:[%s336] sm:%s328] %v337
                %v339 = vld [vmem:[%s335 + $0x8] sm:%s328]
                %340 = vst [vmem:[%s336 + $0x8] sm:%s328] %v339
                %v341 = vld [vmem:[%s335 + $0x10] sm:%s328]
                %342 = vst [vmem:[%s336 + $0x10] sm:%s328] %v341
                %v343 = vld [vmem:[%s335 + $0x18] sm:%s328]
                %344 = vst [vmem:[%s336 + $0x18] sm:%s328] %v343
                %v345 = vld [vmem:[%s335 + $0x20] sm:%s328]
                %346 = vst [vmem:[%s336 + $0x20] sm:%s328] %v345
                %v347 = vld [vmem:[%s335 + $0x28] sm:%s328]
                %348 = vst [vmem:[%s336 + $0x28] sm:%s328] %v347
                %v349 = vld [vmem:[%s335 + $0x30] sm:%s328]
                %350 = vst [vmem:[%s336 + $0x30] sm:%s328] %v349
                %v351 = vld [vmem:[%s335 + $0x38] sm:%s328]
                %352 = vst [vmem:[%s336 + $0x38] sm:%s328] %v351
                %v353 = vld [vmem:[%s335 + $0x40] sm:%s328]
                %354 = vst [vmem:[%s336 + $0x40] sm:%s328] %v353
                %v355 = vld [vmem:[%s335 + $0x48] sm:%s328]
                %356 = vst [vmem:[%s336 + $0x48] sm:%s328] %v355
                %v357 = vld [vmem:[%s335 + $0x50] sm:%s328]
                %358 = vst [vmem:[%s336 + $0x50] sm:%s328] %v357
                %v359 = vld [vmem:[%s335 + $0x58] sm:%s328]
                %360 = vst [vmem:[%s336 + $0x58] sm:%s328] %v359
                %v361 = vld [vmem:[%s335 + $0x60] sm:%s328]
                %362 = vst [vmem:[%s336 + $0x60] sm:%s328] %v361
                %v363 = vld [vmem:[%s335 + $0x68] sm:%s328]
                %364 = vst [vmem:[%s336 + $0x68] sm:%s328] %v363
                %v365 = vld [vmem:[%s335 + $0x70] sm:%s328]
                %366 = vst [vmem:[%s336 + $0x70] sm:%s328] %v365
                %v367 = vld [vmem:[%s335 + $0x78] sm:%s328]
                %368 = vst [vmem:[%s336 + $0x78] sm:%s328] %v367
                %v369 = vld [vmem:[%s335 + $0x100] sm:%s328]
                %370 = vst [vmem:[%s336 + $0x80] sm:%s328] %v369
                %v371 = vld [vmem:[%s335 + $0x108] sm:%s328]
                %372 = vst [vmem:[%s336 + $0x88] sm:%s328] %v371
                %v373 = vld [vmem:[%s335 + $0x110] sm:%s328]
                %374 = vst [vmem:[%s336 + $0x90] sm:%s328] %v373
                %v375 = vld [vmem:[%s335 + $0x118] sm:%s328]
                %376 = vst [vmem:[%s336 + $0x98] sm:%s328] %v375
                %v377 = vld [vmem:[%s335 + $0x120] sm:%s328]
                %378 = vst [vmem:[%s336 + $0xa0] sm:%s328] %v377
                %v379 = vld [vmem:[%s335 + $0x128] sm:%s328]
                %380 = vst [vmem:[%s336 + $0xa8] sm:%s328] %v379
                %v381 = vld [vmem:[%s335 + $0x130] sm:%s328]
                %382 = vst [vmem:[%s336 + $0xb0] sm:%s328] %v381
                %v383 = vld [vmem:[%s335 + $0x138] sm:%s328]
                %384 = vst [vmem:[%s336 + $0xb8] sm:%s328] %v383
                %v385 = vld [vmem:[%s335 + $0x140] sm:%s328]
                %386 = vst [vmem:[%s336 + $0xc0] sm:%s328] %v385
                %v387 = vld [vmem:[%s335 + $0x148] sm:%s328]
                %388 = vst [vmem:[%s336 + $0xc8] sm:%s328] %v387
                %v389 = vld [vmem:[%s335 + $0x150] sm:%s328]
                %390 = vst [vmem:[%s336 + $0xd0] sm:%s328] %v389
                %v391 = vld [vmem:[%s335 + $0x158] sm:%s328]
                %392 = vst [vmem:[%s336 + $0xd8] sm:%s328] %v391
                %v393 = vld [vmem:[%s335 + $0x160] sm:%s328]
                %394 = vst [vmem:[%s336 + $0xe0] sm:%s328] %v393
                %v395 = vld [vmem:[%s335 + $0x168] sm:%s328]
                %396 = vst [vmem:[%s336 + $0xe8] sm:%s328] %v395
                %v397 = vld [vmem:[%s335 + $0x170] sm:%s328]
                %398 = vst [vmem:[%s336 + $0xf0] sm:%s328] %v397
                %v399 = vld [vmem:[%s335 + $0x178] sm:%s328]
                %400 = vst [vmem:[%s336 + $0xf8] sm:%s328] %v399
                %v401 = vld [vmem:[%s335 + $0x200] sm:%s328]
                %402 = vst [vmem:[%s336 + $0x100] sm:%s328] %v401
                %v403 = vld [vmem:[%s335 + $0x208] sm:%s328]
                %404 = vst [vmem:[%s336 + $0x108] sm:%s328] %v403
                %v405 = vld [vmem:[%s335 + $0x210] sm:%s328]
                %406 = vst [vmem:[%s336 + $0x110] sm:%s328] %v405
                %v407 = vld [vmem:[%s335 + $0x218] sm:%s328]
                %408 = vst [vmem:[%s336 + $0x118] sm:%s328] %v407
                %v409 = vld [vmem:[%s335 + $0x220] sm:%s328]
                %410 = vst [vmem:[%s336 + $0x120] sm:%s328] %v409
                %v411 = vld [vmem:[%s335 + $0x228] sm:%s328]
                %412 = vst [vmem:[%s336 + $0x128] sm:%s328] %v411
                %v413 = vld [vmem:[%s335 + $0x230] sm:%s328]
                %414 = vst [vmem:[%s336 + $0x130] sm:%s328] %v413
                %v415 = vld [vmem:[%s335 + $0x238] sm:%s328]
                %416 = vst [vmem:[%s336 + $0x138] sm:%s328] %v415
                %v417 = vld [vmem:[%s335 + $0x240] sm:%s328]
                %418 = vst [vmem:[%s336 + $0x140] sm:%s328] %v417
                %v419 = vld [vmem:[%s335 + $0x248] sm:%s328]
                %420 = vst [vmem:[%s336 + $0x148] sm:%s328] %v419
                %v421 = vld [vmem:[%s335 + $0x250] sm:%s328]
                %422 = vst [vmem:[%s336 + $0x150] sm:%s328] %v421
                %v423 = vld [vmem:[%s335 + $0x258] sm:%s328]
                %424 = vst [vmem:[%s336 + $0x158] sm:%s328] %v423
                %v425 = vld [vmem:[%s335 + $0x260] sm:%s328]
                %426 = vst [vmem:[%s336 + $0x160] sm:%s328] %v425
                %v427 = vld [vmem:[%s335 + $0x268] sm:%s328]
                %428 = vst [vmem:[%s336 + $0x168] sm:%s328] %v427
                %v429 = vld [vmem:[%s335 + $0x270] sm:%s328]
                %430 = vst [vmem:[%s336 + $0x170] sm:%s328] %v429
                %v431 = vld [vmem:[%s335 + $0x278] sm:%s328]
                %432 = vst [vmem:[%s336 + $0x178] sm:%s328] %v431
                %v433 = vld [vmem:[%s335 + $0x300] sm:%s328]
                %434 = vst [vmem:[%s336 + $0x180] sm:%s328] %v433
                %v435 = vld [vmem:[%s335 + $0x308] sm:%s328]
                %436 = vst [vmem:[%s336 + $0x188] sm:%s328] %v435
                %v437 = vld [vmem:[%s335 + $0x310] sm:%s328]
                %438 = vst [vmem:[%s336 + $0x190] sm:%s328] %v437
                %v439 = vld [vmem:[%s335 + $0x318] sm:%s328]
                %440 = vst [vmem:[%s336 + $0x198] sm:%s328] %v439
                %v441 = vld [vmem:[%s335 + $0x320] sm:%s328]
                %442 = vst [vmem:[%s336 + $0x1a0] sm:%s328] %v441
                %v443 = vld [vmem:[%s335 + $0x328] sm:%s328]
                %444 = vst [vmem:[%s336 + $0x1a8] sm:%s328] %v443
                %v445 = vld [vmem:[%s335 + $0x330] sm:%s328]
                %446 = vst [vmem:[%s336 + $0x1b0] sm:%s328] %v445
                %v447 = vld [vmem:[%s335 + $0x338] sm:%s328]
                %448 = vst [vmem:[%s336 + $0x1b8] sm:%s328] %v447
                %v449 = vld [vmem:[%s335 + $0x340] sm:%s328]
                %450 = vst [vmem:[%s336 + $0x1c0] sm:%s328] %v449
                %v451 = vld [vmem:[%s335 + $0x348] sm:%s328]
                %452 = vst [vmem:[%s336 + $0x1c8] sm:%s328] %v451
                %v453 = vld [vmem:[%s335 + $0x350] sm:%s328]
                %454 = vst [vmem:[%s336 + $0x1d0] sm:%s328] %v453
                %v455 = vld [vmem:[%s335 + $0x358] sm:%s328]
                %456 = vst [vmem:[%s336 + $0x1d8] sm:%s328] %v455
                %v457 = vld [vmem:[%s335 + $0x360] sm:%s328]
                %458 = vst [vmem:[%s336 + $0x1e0] sm:%s328] %v457
                %v459 = vld [vmem:[%s335 + $0x368] sm:%s328]
                %460 = vst [vmem:[%s336 + $0x1e8] sm:%s328] %v459
                %v461 = vld [vmem:[%s335 + $0x370] sm:%s328]
                %462 = vst [vmem:[%s336 + $0x1f0] sm:%s328] %v461
                %v463 = vld [vmem:[%s335 + $0x378] sm:%s328]
                %464 = vst [vmem:[%s336 + $0x1f8] sm:%s328] %v463
                %v465 = vld [vmem:[%s335 + $0x400] sm:%s328]
                %466 = vst [vmem:[%s336 + $0x200] sm:%s328] %v465
                %v467 = vld [vmem:[%s335 + $0x408] sm:%s328]
                %468 = vst [vmem:[%s336 + $0x208] sm:%s328] %v467
                %v469 = vld [vmem:[%s335 + $0x410] sm:%s328]
                %470 = vst [vmem:[%s336 + $0x210] sm:%s328] %v469
                %v471 = vld [vmem:[%s335 + $0x418] sm:%s328]
                %472 = vst [vmem:[%s336 + $0x218] sm:%s328] %v471
                %v473 = vld [vmem:[%s335 + $0x420] sm:%s328]
                %474 = vst [vmem:[%s336 + $0x220] sm:%s328] %v473
                %v475 = vld [vmem:[%s335 + $0x428] sm:%s328]
                %476 = vst [vmem:[%s336 + $0x228] sm:%s328] %v475
                %v477 = vld [vmem:[%s335 + $0x430] sm:%s328]
                %478 = vst [vmem:[%s336 + $0x230] sm:%s328] %v477
                %v479 = vld [vmem:[%s335 + $0x438] sm:%s328]
                %480 = vst [vmem:[%s336 + $0x238] sm:%s328] %v479
                %v481 = vld [vmem:[%s335 + $0x440] sm:%s328]
                %482 = vst [vmem:[%s336 + $0x240] sm:%s328] %v481
                %v483 = vld [vmem:[%s335 + $0x448] sm:%s328]
                %484 = vst [vmem:[%s336 + $0x248] sm:%s328] %v483
                %v485 = vld [vmem:[%s335 + $0x450] sm:%s328]
                %486 = vst [vmem:[%s336 + $0x250] sm:%s328] %v485
                %v487 = vld [vmem:[%s335 + $0x458] sm:%s328]
                %488 = vst [vmem:[%s336 + $0x258] sm:%s328] %v487
                %v489 = vld [vmem:[%s335 + $0x460] sm:%s328]
                %490 = vst [vmem:[%s336 + $0x260] sm:%s328] %v489
                %v491 = vld [vmem:[%s335 + $0x468] sm:%s328]
                %492 = vst [vmem:[%s336 + $0x268] sm:%s328] %v491
                %v493 = vld [vmem:[%s335 + $0x470] sm:%s328]
                %494 = vst [vmem:[%s336 + $0x270] sm:%s328] %v493
                %v495 = vld [vmem:[%s335 + $0x478] sm:%s328]
                %496 = vst [vmem:[%s336 + $0x278] sm:%s328] %v495
                %v497 = vld [vmem:[%s335 + $0x500] sm:%s328]
                %498 = vst [vmem:[%s336 + $0x280] sm:%s328] %v497
                %v499 = vld [vmem:[%s335 + $0x508] sm:%s328]
                %500 = vst [vmem:[%s336 + $0x288] sm:%s328] %v499
                %v501 = vld [vmem:[%s335 + $0x510] sm:%s328]
                %502 = vst [vmem:[%s336 + $0x290] sm:%s328] %v501
                %v503 = vld [vmem:[%s335 + $0x518] sm:%s328]
                %504 = vst [vmem:[%s336 + $0x298] sm:%s328] %v503
                %v505 = vld [vmem:[%s335 + $0x520] sm:%s328]
                %506 = vst [vmem:[%s336 + $0x2a0] sm:%s328] %v505
                %v507 = vld [vmem:[%s335 + $0x528] sm:%s328]
                %508 = vst [vmem:[%s336 + $0x2a8] sm:%s328] %v507
                %v509 = vld [vmem:[%s335 + $0x530] sm:%s328]
                %510 = vst [vmem:[%s336 + $0x2b0] sm:%s328] %v509
                %v511 = vld [vmem:[%s335 + $0x538] sm:%s328]
                %512 = vst [vmem:[%s336 + $0x2b8] sm:%s328] %v511
                %v513 = vld [vmem:[%s335 + $0x540] sm:%s328]
                %514 = vst [vmem:[%s336 + $0x2c0] sm:%s328] %v513
                %v515 = vld [vmem:[%s335 + $0x548] sm:%s328]
                %516 = vst [vmem:[%s336 + $0x2c8] sm:%s328] %v515
                %v517 = vld [vmem:[%s335 + $0x550] sm:%s328]
                %518 = vst [vmem:[%s336 + $0x2d0] sm:%s328] %v517
                %v519 = vld [vmem:[%s335 + $0x558] sm:%s328]
                %520 = vst [vmem:[%s336 + $0x2d8] sm:%s328] %v519
                %v521 = vld [vmem:[%s335 + $0x560] sm:%s328]
                %522 = vst [vmem:[%s336 + $0x2e0] sm:%s328] %v521
                %v523 = vld [vmem:[%s335 + $0x568] sm:%s328]
                %524 = vst [vmem:[%s336 + $0x2e8] sm:%s328] %v523
                %v525 = vld [vmem:[%s335 + $0x570] sm:%s328]
                %526 = vst [vmem:[%s336 + $0x2f0] sm:%s328] %v525
                %v527 = vld [vmem:[%s335 + $0x578] sm:%s328]
                %528 = vst [vmem:[%s336 + $0x2f8] sm:%s328] %v527
                %v529 = vld [vmem:[%s335 + $0x600] sm:%s328]
                %530 = vst [vmem:[%s336 + $0x300] sm:%s328] %v529
                %v531 = vld [vmem:[%s335 + $0x608] sm:%s328]
                %532 = vst [vmem:[%s336 + $0x308] sm:%s328] %v531
                %v533 = vld [vmem:[%s335 + $0x610] sm:%s328]
                %534 = vst [vmem:[%s336 + $0x310] sm:%s328] %v533
                %v535 = vld [vmem:[%s335 + $0x618] sm:%s328]
                %536 = vst [vmem:[%s336 + $0x318] sm:%s328] %v535
                %v537 = vld [vmem:[%s335 + $0x620] sm:%s328]
                %538 = vst [vmem:[%s336 + $0x320] sm:%s328] %v537
                %v539 = vld [vmem:[%s335 + $0x628] sm:%s328]
                %540 = vst [vmem:[%s336 + $0x328] sm:%s328] %v539
                %v541 = vld [vmem:[%s335 + $0x630] sm:%s328]
                %542 = vst [vmem:[%s336 + $0x330] sm:%s328] %v541
                %v543 = vld [vmem:[%s335 + $0x638] sm:%s328]
                %544 = vst [vmem:[%s336 + $0x338] sm:%s328] %v543
                %v545 = vld [vmem:[%s335 + $0x640] sm:%s328]
                %546 = vst [vmem:[%s336 + $0x340] sm:%s328] %v545
                %v547 = vld [vmem:[%s335 + $0x648] sm:%s328]
                %548 = vst [vmem:[%s336 + $0x348] sm:%s328] %v547
                %v549 = vld [vmem:[%s335 + $0x650] sm:%s328]
                %550 = vst [vmem:[%s336 + $0x350] sm:%s328] %v549
                %v551 = vld [vmem:[%s335 + $0x658] sm:%s328]
                %552 = vst [vmem:[%s336 + $0x358] sm:%s328] %v551
                %v553 = vld [vmem:[%s335 + $0x660] sm:%s328]
                %554 = vst [vmem:[%s336 + $0x360] sm:%s328] %v553
                %v555 = vld [vmem:[%s335 + $0x668] sm:%s328]
                %556 = vst [vmem:[%s336 + $0x368] sm:%s328] %v555
                %v557 = vld [vmem:[%s335 + $0x670] sm:%s328]
                %558 = vst [vmem:[%s336 + $0x370] sm:%s328] %v557
                %v559 = vld [vmem:[%s335 + $0x678] sm:%s328]
                %560 = vst [vmem:[%s336 + $0x378] sm:%s328] %v559
                %v561 = vld [vmem:[%s335 + $0x700] sm:%s328]
                %562 = vst [vmem:[%s336 + $0x380] sm:%s328] %v561
                %v563 = vld [vmem:[%s335 + $0x708] sm:%s328]
                %564 = vst [vmem:[%s336 + $0x388] sm:%s328] %v563
                %v565 = vld [vmem:[%s335 + $0x710] sm:%s328]
                %566 = vst [vmem:[%s336 + $0x390] sm:%s328] %v565
                %v567 = vld [vmem:[%s335 + $0x718] sm:%s328]
                %568 = vst [vmem:[%s336 + $0x398] sm:%s328] %v567
                %v569 = vld [vmem:[%s335 + $0x720] sm:%s328]
                %570 = vst [vmem:[%s336 + $0x3a0] sm:%s328] %v569
                %v571 = vld [vmem:[%s335 + $0x728] sm:%s328]
                %572 = vst [vmem:[%s336 + $0x3a8] sm:%s328] %v571
                %v573 = vld [vmem:[%s335 + $0x730] sm:%s328]
                %574 = vst [vmem:[%s336 + $0x3b0] sm:%s328] %v573
                %v575 = vld [vmem:[%s335 + $0x738] sm:%s328]
                %576 = vst [vmem:[%s336 + $0x3b8] sm:%s328] %v575
                %v577 = vld [vmem:[%s335 + $0x740] sm:%s328]
                %578 = vst [vmem:[%s336 + $0x3c0] sm:%s328] %v577
                %v579 = vld [vmem:[%s335 + $0x748] sm:%s328]
                %580 = vst [vmem:[%s336 + $0x3c8] sm:%s328] %v579
                %v581 = vld [vmem:[%s335 + $0x750] sm:%s328]
                %582 = vst [vmem:[%s336 + $0x3d0] sm:%s328] %v581
                %v583 = vld [vmem:[%s335 + $0x758] sm:%s328]
                %584 = vst [vmem:[%s336 + $0x3d8] sm:%s328] %v583
                %v585 = vld [vmem:[%s335 + $0x760] sm:%s328]
                %586 = vst [vmem:[%s336 + $0x3e0] sm:%s328] %v585
                %v587 = vld [vmem:[%s335 + $0x768] sm:%s328]
                %588 = vst [vmem:[%s336 + $0x3e8] sm:%s328] %v587
                %v589 = vld [vmem:[%s335 + $0x770] sm:%s328]
                %590 = vst [vmem:[%s336 + $0x3f0] sm:%s328] %v589
                %v591 = vld [vmem:[%s335 + $0x778] sm:%s328]
                %592 = vst [vmem:[%s336 + $0x3f8] sm:%s328] %v591
              $region86: #{tpu_custom_call.1} parent=80 // loop_footer
                %s334 = sadd.s32 1, %s330
              $region87: #{tpu_custom_call.1} parent=80 // loop_footer_branch
                %329 = sbr.rel target = $region83
              $region88: #{tpu_custom_call.1} parent=80 // loop_exit
                _
            $region81: #{tpu_custom_call.1} parent=72 // pred_fallthru
              _
          $region73: #{tpu_custom_call.1} parent=68 // pred_fallthru
            _
          %861 = vnop
        $region69: #{tpu_custom_call.1} parent=23 // pred_fallthru
          _
        // Predicated region
        $region104: #{tpu_custom_call.1} parent=23 // pred_check
          %p862 = pneg %p145
        $region105: #{tpu_custom_call.1} parent=23 // pred_check_branch
          %864 = sbr.rel (%p862) target = $region107
        $region106: #{tpu_custom_call.1} parent=23 // pred_region
          %p865 = scmp.lt.s32.totalorder %s22, 1
          %s866 = scalar_select %p865, %s22, 1
          %s867 = smul.addr %s866, 8
          %s868 = scalar_lea.vmem %s4, %s867
        $region107: #{tpu_custom_call.1} parent=23 // pred_fallthru
          _
        // Predicated region
        $region108: #{tpu_custom_call.1} parent=23 // pred_check
          %p869 = pneg %p171
        $region109: #{tpu_custom_call.1} parent=23 // pred_check_branch
          %871 = sbr.rel (%p869) target = $region111
        $region110: #{tpu_custom_call.1} parent=23 // pred_region
          %p872 = scmp.lt.s32.totalorder %s22, 1
          %s873 = scalar_select %p872, %s22, 1
          %s874 = smul.addr %s873, 8
          %s875 = scalar_lea.vmem %s5, %s874
        $region111: #{tpu_custom_call.1} parent=23 // pred_fallthru
          _
      $region24: #{tpu_custom_call.1} parent=5 // pred_fallthru
        _
      %p876 = scmp.le.s32.totalorder 1, %s15
      %p877 = scmp.lt.s32.totalorder %s15, 5
      %p878 = pnand %p876, %p877
      %p879 = pneg %p878
      // Predicated region
      $region112: #{tpu_custom_call.1} parent=5 // pred_check
        _
      $region113: #{tpu_custom_call.1} parent=5 // pred_check_branch
        %881 = sbr.rel (%p878) target = $region115
      $region114: #{tpu_custom_call.1} parent=5 // pred_region
        %s882 = ssub.s32 %s15, 1
        %s883 = sand.u32 %s42, 1
        %s884 = sand.u32 %s42, 1
        %s885 = smul.addr %s884, 8
        %s886 = scalar_lea.vmem [#allocation3], %s885
        // Predicated region
        $region116: #{tpu_custom_call.1} parent=114 // pred_check
          %p887 = pneg %p55
        $region117: #{tpu_custom_call.1} parent=114 // pred_check_branch
          %889 = sbr.rel (%p887) target = $region119
        $region118: #{tpu_custom_call.1} parent=114 // pred_region
          _
        $region119: #{tpu_custom_call.1} parent=114 // pred_fallthru
          _
        %s890 = sand.u32 %s70, 1
        %s891 = sand.u32 %s70, 1
        %s892 = smul.addr %s891, 1024
        %s893 = scalar_lea.vmem [#allocation4], %s892
        // Predicated region
        $region120: #{tpu_custom_call.1} parent=114 // pred_check
          %p894 = pneg %p83
        $region121: #{tpu_custom_call.1} parent=114 // pred_check_branch
          %896 = sbr.rel (%p894) target = $region123
        $region122: #{tpu_custom_call.1} parent=114 // pred_region
          _
        $region123: #{tpu_custom_call.1} parent=114 // pred_fallthru
          _
        %s897 = sand.u32 %s42, 1
        %s898 = sand.u32 %s42, 1
        %s899 = smul.addr %s898, 8
        %s900 = scalar_lea.vmem [#allocation3], %s899
        %p901 = pneg %p55
        %p902 = pneg %p52
        %s903 = sand.u32 %s70, 1
        %s904 = sand.u32 %s70, 1
        %s905 = smul.addr %s904, 1024
        %s906 = scalar_lea.vmem [#allocation4], %s905
        %p907 = pneg %p83
        %p908 = pneg %p80
        %p909 = pneg %p104
        %p910 = pneg %p101
        %p911 = pneg %p125
        %p912 = pneg %p122
        %p913 = scmp.lt.s32.totalorder %s24, 1
        %s914 = scalar_select %p913, %s24, 1
        %s915 = smul.addr %s914, 8
        %s916 = scalar_lea.vmem %s4, %s915
        %p917 = pneg %p151
        %p918 = pneg %p148
        %p919 = scmp.lt.s32.totalorder %s24, 1
        %s920 = scalar_select %p919, %s24, 1
        %s921 = smul.addr %s920, 8
        %s922 = scalar_lea.vmem %s5, %s921
        %p923 = pneg %p177
        %p924 = pneg %p174
        %p925 = pneg %p203
        %p926 = pneg %p200
        %s927 = sand.u32 %s190, 1
        %s928 = scalar_lea.sflag [#allocation6], %s927
        %s929 = sand.u32 %s190, 1
        %s930 = scalar_lea.vmem [#allocation5], %s929
        %s931 = smul.u32 8, %s24
        %s932 = smul.u32 8, %s24
        %s933 = smul.u32 16, %s25
        %p934 = scmp.lt.s32.totalorder %s24, 1
        %s935 = scalar_select %p934, %s24, 1
        %s936 = smul.addr %s935, 8
        %s937 = scalar_lea.vmem %s4, %s936
        %p938 = scmp.lt.s32.totalorder %s24, 1
        %s939 = scalar_select %p938, %s24, 1
        %s940 = smul.addr %s939, 8
        %s941 = scalar_lea.vmem %s5, %s940
        %p942 = scmp.eq.s32.totalorder %s25, 0
        // Predicated region
        $region124: #{tpu_custom_call.1} parent=114 // pred_check
          %p943 = pneg %p942
        $region125: #{tpu_custom_call.1} parent=114 // pred_check_branch
          %945 = sbr.rel (%p943) target = $region127
        $region126: #{tpu_custom_call.1} parent=114 // pred_region
          %vm946 = vcmask 253952
          %947 = vst.msk [vmem:[#allocation2] sm:$0x1] %vm946, 0.0
          %948 = vst.msk [vmem:[#allocation2 + $0x1] sm:$0x1] %vm946, 0.0
          %949 = vst.msk [vmem:[#allocation2 + $0x2] sm:$0x1] %vm946, 0.0
          %950 = vst.msk [vmem:[#allocation2 + $0x3] sm:$0x1] %vm946, 0.0
          %951 = vst.msk [vmem:[#allocation2 + $0x4] sm:$0x1] %vm946, 0.0
          %952 = vst.msk [vmem:[#allocation2 + $0x5] sm:$0x1] %vm946, 0.0
          %953 = vst.msk [vmem:[#allocation2 + $0x6] sm:$0x1] %vm946, 0.0
          %954 = vst.msk [vmem:[#allocation2 + $0x7] sm:$0x1] %vm946, 0.0
        $region127: #{tpu_custom_call.1} parent=114 // pred_fallthru
          _
        %v955 = vld [vmem:[#allocation2] sm:$0x1]
        %v956 = vld [vmem:[#allocation2 + $0x1] sm:$0x1]
        %v957 = vld [vmem:[#allocation2 + $0x2] sm:$0x1]
        %v958 = vld [vmem:[#allocation2 + $0x3] sm:$0x1]
        %v959 = vld [vmem:[#allocation2 + $0x4] sm:$0x1]
        %v960 = vld [vmem:[#allocation2 + $0x5] sm:$0x1]
        %v961 = vld [vmem:[#allocation2 + $0x6] sm:$0x1]
        %v962 = vld [vmem:[#allocation2 + $0x7] sm:$0x1]
        %v963 = vld [vmem:[%s886] sm:$0x1]
        %v964 = vld [vmem:[%s886 + $0x1] sm:$0x1]
        %v965 = vld [vmem:[%s886 + $0x2] sm:$0x1]
        %v966 = vld [vmem:[%s886 + $0x3] sm:$0x1]
        %v967 = vld [vmem:[%s886 + $0x4] sm:$0x1]
        %v968 = vld [vmem:[%s886 + $0x5] sm:$0x1]
        %v969 = vld [vmem:[%s886 + $0x6] sm:$0x1]
        %v970 = vld [vmem:[%s886 + $0x7] sm:$0x1]
        %v971 = vld [vmem:[%s893] sm:$0xff]
        %v972 = vld [vmem:[%s893 + $0x8] sm:$0xff]
        %v973 = vld [vmem:[%s893 + $0x10] sm:$0xff]
        %v974 = vld [vmem:[%s893 + $0x18] sm:$0xff]
        %v975 = vld [vmem:[%s893 + $0x20] sm:$0xff]
        %v976 = vld [vmem:[%s893 + $0x28] sm:$0xff]
        %v977 = vld [vmem:[%s893 + $0x30] sm:$0xff]
        %v978 = vld [vmem:[%s893 + $0x38] sm:$0xff]
        %v979 = vld [vmem:[%s893 + $0x40] sm:$0xff]
        %v980 = vld [vmem:[%s893 + $0x48] sm:$0xff]
        %v981 = vld [vmem:[%s893 + $0x50] sm:$0xff]
        %v982 = vld [vmem:[%s893 + $0x58] sm:$0xff]
        %v983 = vld [vmem:[%s893 + $0x60] sm:$0xff]
        %v984 = vld [vmem:[%s893 + $0x68] sm:$0xff]
        %v985 = vld [vmem:[%s893 + $0x70] sm:$0xff]
        %v986 = vld [vmem:[%s893 + $0x78] sm:$0xff]
        %v987 = vld [vmem:[%s893 + $0x80] sm:$0xff]
        %v988 = vld [vmem:[%s893 + $0x88] sm:$0xff]
        %v989 = vld [vmem:[%s893 + $0x90] sm:$0xff]
        %v990 = vld [vmem:[%s893 + $0x98] sm:$0xff]
        %v991 = vld [vmem:[%s893 + $0xa0] sm:$0xff]
        %v992 = vld [vmem:[%s893 + $0xa8] sm:$0xff]
        %v993 = vld [vmem:[%s893 + $0xb0] sm:$0xff]
        %v994 = vld [vmem:[%s893 + $0xb8] sm:$0xff]
        %v995 = vld [vmem:[%s893 + $0xc0] sm:$0xff]
        %v996 = vld [vmem:[%s893 + $0xc8] sm:$0xff]
        %v997 = vld [vmem:[%s893 + $0xd0] sm:$0xff]
        %v998 = vld [vmem:[%s893 + $0xd8] sm:$0xff]
        %v999 = vld [vmem:[%s893 + $0xe0] sm:$0xff]
        %v1000 = vld [vmem:[%s893 + $0xe8] sm:$0xff]
        %v1001 = vld [vmem:[%s893 + $0xf0] sm:$0xff]
        %v1002 = vld [vmem:[%s893 + $0xf8] sm:$0xff]
        %v1003 = vld [vmem:[%s893 + $0x100] sm:$0xff]
        %v1004 = vld [vmem:[%s893 + $0x108] sm:$0xff]
        %v1005 = vld [vmem:[%s893 + $0x110] sm:$0xff]
        %v1006 = vld [vmem:[%s893 + $0x118] sm:$0xff]
        %v1007 = vld [vmem:[%s893 + $0x120] sm:$0xff]
        %v1008 = vld [vmem:[%s893 + $0x128] sm:$0xff]
        %v1009 = vld [vmem:[%s893 + $0x130] sm:$0xff]
        %v1010 = vld [vmem:[%s893 + $0x138] sm:$0xff]
        %v1011 = vld [vmem:[%s893 + $0x140] sm:$0xff]
        %v1012 = vld [vmem:[%s893 + $0x148] sm:$0xff]
        %v1013 = vld [vmem:[%s893 + $0x150] sm:$0xff]
        %v1014 = vld [vmem:[%s893 + $0x158] sm:$0xff]
        %v1015 = vld [vmem:[%s893 + $0x160] sm:$0xff]
        %v1016 = vld [vmem:[%s893 + $0x168] sm:$0xff]
        %v1017 = vld [vmem:[%s893 + $0x170] sm:$0xff]
        %v1018 = vld [vmem:[%s893 + $0x178] sm:$0xff]
        %v1019 = vld [vmem:[%s893 + $0x180] sm:$0xff]
        %v1020 = vld [vmem:[%s893 + $0x188] sm:$0xff]
        %v1021 = vld [vmem:[%s893 + $0x190] sm:$0xff]
        %v1022 = vld [vmem:[%s893 + $0x198] sm:$0xff]
        %v1023 = vld [vmem:[%s893 + $0x1a0] sm:$0xff]
        %v1024 = vld [vmem:[%s893 + $0x1a8] sm:$0xff]
        %v1025 = vld [vmem:[%s893 + $0x1b0] sm:$0xff]
        %v1026 = vld [vmem:[%s893 + $0x1b8] sm:$0xff]
        %v1027 = vld [vmem:[%s893 + $0x1c0] sm:$0xff]
        %v1028 = vld [vmem:[%s893 + $0x1c8] sm:$0xff]
        %v1029 = vld [vmem:[%s893 + $0x1d0] sm:$0xff]
        %v1030 = vld [vmem:[%s893 + $0x1d8] sm:$0xff]
        %v1031 = vld [vmem:[%s893 + $0x1e0] sm:$0xff]
        %v1032 = vld [vmem:[%s893 + $0x1e8] sm:$0xff]
        %v1033 = vld [vmem:[%s893 + $0x1f0] sm:$0xff]
        %v1034 = vld [vmem:[%s893 + $0x1f8] sm:$0xff]
        %v1035 = vld [vmem:[%s893 + $0x200] sm:$0xff]
        %v1036 = vld [vmem:[%s893 + $0x208] sm:$0xff]
        %v1037 = vld [vmem:[%s893 + $0x210] sm:$0xff]
        %v1038 = vld [vmem:[%s893 + $0x218] sm:$0xff]
        %v1039 = vld [vmem:[%s893 + $0x220] sm:$0xff]
        %v1040 = vld [vmem:[%s893 + $0x228] sm:$0xff]
        %v1041 = vld [vmem:[%s893 + $0x230] sm:$0xff]
        %v1042 = vld [vmem:[%s893 + $0x238] sm:$0xff]
        %v1043 = vld [vmem:[%s893 + $0x240] sm:$0xff]
        %v1044 = vld [vmem:[%s893 + $0x248] sm:$0xff]
        %v1045 = vld [vmem:[%s893 + $0x250] sm:$0xff]
        %v1046 = vld [vmem:[%s893 + $0x258] sm:$0xff]
        %v1047 = vld [vmem:[%s893 + $0x260] sm:$0xff]
        %v1048 = vld [vmem:[%s893 + $0x268] sm:$0xff]
        %v1049 = vld [vmem:[%s893 + $0x270] sm:$0xff]
        %v1050 = vld [vmem:[%s893 + $0x278] sm:$0xff]
        %v1051 = vld [vmem:[%s893 + $0x280] sm:$0xff]
        %v1052 = vld [vmem:[%s893 + $0x288] sm:$0xff]
        %v1053 = vld [vmem:[%s893 + $0x290] sm:$0xff]
        %v1054 = vld [vmem:[%s893 + $0x298] sm:$0xff]
        %v1055 = vld [vmem:[%s893 + $0x2a0] sm:$0xff]
        %v1056 = vld [vmem:[%s893 + $0x2a8] sm:$0xff]
        %v1057 = vld [vmem:[%s893 + $0x2b0] sm:$0xff]
        %v1058 = vld [vmem:[%s893 + $0x2b8] sm:$0xff]
        %v1059 = vld [vmem:[%s893 + $0x2c0] sm:$0xff]
        %v1060 = vld [vmem:[%s893 + $0x2c8] sm:$0xff]
        %v1061 = vld [vmem:[%s893 + $0x2d0] sm:$0xff]
        %v1062 = vld [vmem:[%s893 + $0x2d8] sm:$0xff]
        %v1063 = vld [vmem:[%s893 + $0x2e0] sm:$0xff]
        %v1064 = vld [vmem:[%s893 + $0x2e8] sm:$0xff]
        %v1065 = vld [vmem:[%s893 + $0x2f0] sm:$0xff]
        %v1066 = vld [vmem:[%s893 + $0x2f8] sm:$0xff]
        %v1067 = vld [vmem:[%s893 + $0x300] sm:$0xff]
        %v1068 = vld [vmem:[%s893 + $0x308] sm:$0xff]
        %v1069 = vld [vmem:[%s893 + $0x310] sm:$0xff]
        %v1070 = vld [vmem:[%s893 + $0x318] sm:$0xff]
        %v1071 = vld [vmem:[%s893 + $0x320] sm:$0xff]
        %v1072 = vld [vmem:[%s893 + $0x328] sm:$0xff]
        %v1073 = vld [vmem:[%s893 + $0x330] sm:$0xff]
        %v1074 = vld [vmem:[%s893 + $0x338] sm:$0xff]
        %v1075 = vld [vmem:[%s893 + $0x340] sm:$0xff]
        %v1076 = vld [vmem:[%s893 + $0x348] sm:$0xff]
        %v1077 = vld [vmem:[%s893 + $0x350] sm:$0xff]
        %v1078 = vld [vmem:[%s893 + $0x358] sm:$0xff]
        %v1079 = vld [vmem:[%s893 + $0x360] sm:$0xff]
        %v1080 = vld [vmem:[%s893 + $0x368] sm:$0xff]
        %v1081 = vld [vmem:[%s893 + $0x370] sm:$0xff]
        %v1082 = vld [vmem:[%s893 + $0x378] sm:$0xff]
        %v1083 = vld [vmem:[%s893 + $0x380] sm:$0xff]
        %v1084 = vld [vmem:[%s893 + $0x388] sm:$0xff]
        %v1085 = vld [vmem:[%s893 + $0x390] sm:$0xff]
        %v1086 = vld [vmem:[%s893 + $0x398] sm:$0xff]
        %v1087 = vld [vmem:[%s893 + $0x3a0] sm:$0xff]
        %v1088 = vld [vmem:[%s893 + $0x3a8] sm:$0xff]
        %v1089 = vld [vmem:[%s893 + $0x3b0] sm:$0xff]
        %v1090 = vld [vmem:[%s893 + $0x3b8] sm:$0xff]
        %v1091 = vld [vmem:[%s893 + $0x3c0] sm:$0xff]
        %v1092 = vld [vmem:[%s893 + $0x3c8] sm:$0xff]
        %v1093 = vld [vmem:[%s893 + $0x3d0] sm:$0xff]
        %v1094 = vld [vmem:[%s893 + $0x3d8] sm:$0xff]
        %v1095 = vld [vmem:[%s893 + $0x3e0] sm:$0xff]
        %v1096 = vld [vmem:[%s893 + $0x3e8] sm:$0xff]
        %v1097 = vld [vmem:[%s893 + $0x3f0] sm:$0xff]
        %v1098 = vld [vmem:[%s893 + $0x3f8] sm:$0xff]
        %1099 = vmatpush.msra.mxu0 %v986
        %1100 = vmatpush.msra.mxu0 %v985
        %1101 = vmatpush.msra.mxu0 %v984
        %1102 = vmatpush.msra.mxu0 %v983
        %1103 = vmatpush.msra.mxu0 %v982
        %1104 = vmatpush.msra.mxu0 %v981
        %1105 = vmatpush.msra.mxu0 %v980
        %1106 = vmatpush.msra.mxu0 %v979
        %1107 = vmatpush.msra.mxu0 %v978
        %1108 = vmatpush.msra.mxu0 %v977
        %1109 = vmatpush.msra.mxu0 %v976
        %1110 = vmatpush.msra.mxu0 %v975
        %1111 = vmatpush.msra.mxu0 %v974
        %1112 = vmatpush.msra.mxu0 %v973
        %1113 = vmatpush.msra.mxu0 %v972
        %1114 = vmatpush.msra.mxu0 %v971
        %1115 = vmatmul.f32.gmra.mxu0 %v963
        %v1116 = vpop.f32.mrf.mxu0
        %v1117 = vadd.f32 0.0, %v1116
        %1118 = vdwg.mxu0
        %1119 = vmatpush.msra.mxu0 %v1002
        %1120 = vmatpush.msra.mxu0 %v1001
        %1121 = vmatpush.msra.mxu0 %v1000
        %1122 = vmatpush.msra.mxu0 %v999
        %1123 = vmatpush.msra.mxu0 %v998
        %1124 = vmatpush.msra.mxu0 %v997
        %1125 = vmatpush.msra.mxu0 %v996
        %1126 = vmatpush.msra.mxu0 %v995
        %1127 = vmatpush.msra.mxu0 %v994
        %1128 = vmatpush.msra.mxu0 %v993
        %1129 = vmatpush.msra.mxu0 %v992
        %1130 = vmatpush.msra.mxu0 %v991
        %1131 = vmatpush.msra.mxu0 %v990
        %1132 = vmatpush.msra.mxu0 %v989
        %1133 = vmatpush.msra.mxu0 %v988
        %1134 = vmatpush.msra.mxu0 %v987
        %1135 = vmatmul.f32.gmra.mxu0 %v964
        %v1136 = vpop.f32.mrf.mxu0
        %v1137 = vadd.f32 0.0, %v1136
        %1138 = vdwg.mxu0
        %1139 = vmatpush.msra.mxu0 %v1018
        %1140 = vmatpush.msra.mxu0 %v1017
        %1141 = vmatpush.msra.mxu0 %v1016
        %1142 = vmatpush.msra.mxu0 %v1015
        %1143 = vmatpush.msra.mxu0 %v1014
        %1144 = vmatpush.msra.mxu0 %v1013
        %1145 = vmatpush.msra.mxu0 %v1012
        %1146 = vmatpush.msra.mxu0 %v1011
        %1147 = vmatpush.msra.mxu0 %v1010
        %1148 = vmatpush.msra.mxu0 %v1009
        %1149 = vmatpush.msra.mxu0 %v1008
        %1150 = vmatpush.msra.mxu0 %v1007
        %1151 = vmatpush.msra.mxu0 %v1006
        %1152 = vmatpush.msra.mxu0 %v1005
        %1153 = vmatpush.msra.mxu0 %v1004
        %1154 = vmatpush.msra.mxu0 %v1003
        %1155 = vmatmul.f32.gmra.mxu0 %v965
        %v1156 = vpop.f32.mrf.mxu0
        %v1157 = vadd.f32 0.0, %v1156
        %1158 = vdwg.mxu0
        %1159 = vmatpush.msra.mxu0 %v1034
        %1160 = vmatpush.msra.mxu0 %v1033
        %1161 = vmatpush.msra.mxu0 %v1032
        %1162 = vmatpush.msra.mxu0 %v1031
        %1163 = vmatpush.msra.mxu0 %v1030
        %1164 = vmatpush.msra.mxu0 %v1029
        %1165 = vmatpush.msra.mxu0 %v1028
        %1166 = vmatpush.msra.mxu0 %v1027
        %1167 = vmatpush.msra.mxu0 %v1026
        %1168 = vmatpush.msra.mxu0 %v1025
        %1169 = vmatpush.msra.mxu0 %v1024
        %1170 = vmatpush.msra.mxu0 %v1023
        %1171 = vmatpush.msra.mxu0 %v1022
        %1172 = vmatpush.msra.mxu0 %v1021
        %1173 = vmatpush.msra.mxu0 %v1020
        %1174 = vmatpush.msra.mxu0 %v1019
        %1175 = vmatmul.f32.gmra.mxu0 %v966
        %v1176 = vpop.f32.mrf.mxu0
        %v1177 = vadd.f32 0.0, %v1176
        %1178 = vdwg.mxu0
        %1179 = vmatpush.msra.mxu0 %v1050
        %1180 = vmatpush.msra.mxu0 %v1049
        %1181 = vmatpush.msra.mxu0 %v1048
        %1182 = vmatpush.msra.mxu0 %v1047
        %1183 = vmatpush.msra.mxu0 %v1046
        %1184 = vmatpush.msra.mxu0 %v1045
        %1185 = vmatpush.msra.mxu0 %v1044
        %1186 = vmatpush.msra.mxu0 %v1043
        %1187 = vmatpush.msra.mxu0 %v1042
        %1188 = vmatpush.msra.mxu0 %v1041
        %1189 = vmatpush.msra.mxu0 %v1040
        %1190 = vmatpush.msra.mxu0 %v1039
        %1191 = vmatpush.msra.mxu0 %v1038
        %1192 = vmatpush.msra.mxu0 %v1037
        %1193 = vmatpush.msra.mxu0 %v1036
        %1194 = vmatpush.msra.mxu0 %v1035
        %1195 = vmatmul.f32.gmra.mxu0 %v967
        %v1196 = vpop.f32.mrf.mxu0
        %v1197 = vadd.f32 0.0, %v1196
        %1198 = vdwg.mxu0
        %1199 = vmatpush.msra.mxu0 %v1066
        %1200 = vmatpush.msra.mxu0 %v1065
        %1201 = vmatpush.msra.mxu0 %v1064
        %1202 = vmatpush.msra.mxu0 %v1063
        %1203 = vmatpush.msra.mxu0 %v1062
        %1204 = vmatpush.msra.mxu0 %v1061
        %1205 = vmatpush.msra.mxu0 %v1060
        %1206 = vmatpush.msra.mxu0 %v1059
        %1207 = vmatpush.msra.mxu0 %v1058
        %1208 = vmatpush.msra.mxu0 %v1057
        %1209 = vmatpush.msra.mxu0 %v1056
        %1210 = vmatpush.msra.mxu0 %v1055
        %1211 = vmatpush.msra.mxu0 %v1054
        %1212 = vmatpush.msra.mxu0 %v1053
        %1213 = vmatpush.msra.mxu0 %v1052
        %1214 = vmatpush.msra.mxu0 %v1051
        %1215 = vmatmul.f32.gmra.mxu0 %v968
        %v1216 = vpop.f32.mrf.mxu0
        %v1217 = vadd.f32 0.0, %v1216
        %1218 = vdwg.mxu0
        %1219 = vmatpush.msra.mxu0 %v1082
        %1220 = vmatpush.msra.mxu0 %v1081
        %1221 = vmatpush.msra.mxu0 %v1080
        %1222 = vmatpush.msra.mxu0 %v1079
        %1223 = vmatpush.msra.mxu0 %v1078
        %1224 = vmatpush.msra.mxu0 %v1077
        %1225 = vmatpush.msra.mxu0 %v1076
        %1226 = vmatpush.msra.mxu0 %v1075
        %1227 = vmatpush.msra.mxu0 %v1074
        %1228 = vmatpush.msra.mxu0 %v1073
        %1229 = vmatpush.msra.mxu0 %v1072
        %1230 = vmatpush.msra.mxu0 %v1071
        %1231 = vmatpush.msra.mxu0 %v1070
        %1232 = vmatpush.msra.mxu0 %v1069
        %1233 = vmatpush.msra.mxu0 %v1068
        %1234 = vmatpush.msra.mxu0 %v1067
        %1235 = vmatmul.f32.gmra.mxu0 %v969
        %v1236 = vpop.f32.mrf.mxu0
        %v1237 = vadd.f32 0.0, %v1236
        %1238 = vdwg.mxu0
        %1239 = vmatpush.msra.mxu0 %v1098
        %1240 = vmatpush.msra.mxu0 %v1097
        %1241 = vmatpush.msra.mxu0 %v1096
        %1242 = vmatpush.msra.mxu0 %v1095
        %1243 = vmatpush.msra.mxu0 %v1094
        %1244 = vmatpush.msra.mxu0 %v1093
        %1245 = vmatpush.msra.mxu0 %v1092
        %1246 = vmatpush.msra.mxu0 %v1091
        %1247 = vmatpush.msra.mxu0 %v1090
        %1248 = vmatpush.msra.mxu0 %v1089
        %1249 = vmatpush.msra.mxu0 %v1088
        %1250 = vmatpush.msra.mxu0 %v1087
        %1251 = vmatpush.msra.mxu0 %v1086
        %1252 = vmatpush.msra.mxu0 %v1085
        %1253 = vmatpush.msra.mxu0 %v1084
        %1254 = vmatpush.msra.mxu0 %v1083
        %1255 = vmatmul.f32.gmra.mxu0 %v970
        %v1256 = vpop.f32.mrf.mxu0
        %v1257 = vadd.f32 0.0, %v1256
        %1258 = vdwg.mxu0
        %v1259 = vadd.f32 %v955, %v1117
        %v1260 = vadd.f32 %v956, %v1137
        %v1261 = vadd.f32 %v957, %v1157
        %v1262 = vadd.f32 %v958, %v1177
        %v1263 = vadd.f32 %v959, %v1197
        %v1264 = vadd.f32 %v960, %v1217
        %v1265 = vadd.f32 %v961, %v1237
        %v1266 = vadd.f32 %v962, %v1257
        %vm1267 = vcmask 253952
        %1268 = vst.msk [vmem:[#allocation2] sm:$0x1] %vm1267, %v1259
        %1269 = vst.msk [vmem:[#allocation2 + $0x1] sm:$0x1] %vm1267, %v1260
        %1270 = vst.msk [vmem:[#allocation2 + $0x2] sm:$0x1] %vm1267, %v1261
        %1271 = vst.msk [vmem:[#allocation2 + $0x3] sm:$0x1] %vm1267, %v1262
        %1272 = vst.msk [vmem:[#allocation2 + $0x4] sm:$0x1] %vm1267, %v1263
        %1273 = vst.msk [vmem:[#allocation2 + $0x5] sm:$0x1] %vm1267, %v1264
        %1274 = vst.msk [vmem:[#allocation2 + $0x6] sm:$0x1] %vm1267, %v1265
        %1275 = vst.msk [vmem:[#allocation2 + $0x7] sm:$0x1] %vm1267, %v1266
        %p1276 = scmp.eq.s32.totalorder %s25, 1
        // Predicated region
        $region128: #{tpu_custom_call.1} parent=114 // pred_check
          %p1277 = pneg %p1276
        $region129: #{tpu_custom_call.1} parent=114 // pred_check_branch
          %1279 = sbr.rel (%p1277) target = $region131
        $region130: #{tpu_custom_call.1} parent=114 // pred_region
          %v1280 = vld [vmem:[%s941] sm:$0xff]
          %v1281 = vld [vmem:[#allocation2] sm:$0x1]
          %v1282 = vld [vmem:[#allocation2 + $0x1] sm:$0x1]
          %v1283 = vld [vmem:[#allocation2 + $0x2] sm:$0x1]
          %v1284 = vld [vmem:[#allocation2 + $0x3] sm:$0x1]
          %v1285 = vld [vmem:[#allocation2 + $0x4] sm:$0x1]
          %v1286 = vld [vmem:[#allocation2 + $0x5] sm:$0x1]
          %v1287 = vld [vmem:[#allocation2 + $0x6] sm:$0x1]
          %v1288 = vld [vmem:[#allocation2 + $0x7] sm:$0x1]
          %v1289 = vmax.f32 %v1280, 1e-09
          %1291 = vset.pattern.permute.xlu0 1
          %1292 = vperm.xlu0 %1291, %v1289
          %v1293 = vpop.permute.xlu0 %1292
          %v1294 = vperm.slane %v1293, 0
          %v1295 = vperm.slane %v1293, 1
          %v1296 = vperm.slane %v1293, 2
          %v1297 = vperm.slane %v1293, 3
          %v1298 = vperm.slane %v1293, 4
          %v1299 = vperm.slane %v1293, 5
          %v1300 = vperm.slane %v1293, 6
          %v1301 = vperm.slane %v1293, 7
          %v1310 = vrcp.pop %v1294
          %v1311 = vmul.f32 %v1294, %v1310
          %v1312 = vsub.f32 1.0, %v1311
          %v1313 = vmul.f32 %v1310, %v1312
          %v1314 = vadd.f32 %v1310, %v1313
          %vm1315 = vweird.f32 %v1294
          %vm1316 = vweird.f32 %v1310
          %vm1317 = vmor %vm1315, %vm1316
          %v1318 = vsel %vm1317, %v1310, %v1314
          %v1319 = vand.u32 2147483647, %v1294
          %vm1320 = vcmp.eq.f32.partialorder %v1319, 8.507059e+37
          %v1321 = vand.u32 %v1294, 2147483648
          %v1322 = vor.u32 1.1754944e-38, %v1321
          %v1323 = vsel %vm1320, %v1322, %v1318
          %v1324 = vmul.f32 %v1281, %v1323
          %v1325 = vrcp.pop %v1295
          %v1326 = vmul.f32 %v1295, %v1325
          %v1327 = vsub.f32 1.0, %v1326
          %v1328 = vmul.f32 %v1325, %v1327
          %v1329 = vadd.f32 %v1325, %v1328
          %vm1330 = vweird.f32 %v1295
          %vm1331 = vweird.f32 %v1325
          %vm1332 = vmor %vm1330, %vm1331
          %v1333 = vsel %vm1332, %v1325, %v1329
          %v1334 = vand.u32 2147483647, %v1295
          %vm1335 = vcmp.eq.f32.partialorder %v1334, 8.507059e+37
          %v1336 = vand.u32 %v1295, 2147483648
          %v1337 = vor.u32 1.1754944e-38, %v1336
          %v1338 = vsel %vm1335, %v1337, %v1333
          %v1339 = vmul.f32 %v1282, %v1338
          %v1340 = vrcp.pop %v1296
          %v1341 = vmul.f32 %v1296, %v1340
          %v1342 = vsub.f32 1.0, %v1341
          %v1343 = vmul.f32 %v1340, %v1342
          %v1344 = vadd.f32 %v1340, %v1343
          %vm1345 = vweird.f32 %v1296
          %vm1346 = vweird.f32 %v1340
          %vm1347 = vmor %vm1345, %vm1346
          %v1348 = vsel %vm1347, %v1340, %v1344
          %v1349 = vand.u32 2147483647, %v1296
          %vm1350 = vcmp.eq.f32.partialorder %v1349, 8.507059e+37
          %v1351 = vand.u32 %v1296, 2147483648
          %v1352 = vor.u32 1.1754944e-38, %v1351
          %v1353 = vsel %vm1350, %v1352, %v1348
          %v1354 = vmul.f32 %v1283, %v1353
          %v1355 = vrcp.pop %v1297
          %v1356 = vmul.f32 %v1297, %v1355
          %v1357 = vsub.f32 1.0, %v1356
          %v1358 = vmul.f32 %v1355, %v1357
          %v1359 = vadd.f32 %v1355, %v1358
          %vm1360 = vweird.f32 %v1297
          %vm1361 = vweird.f32 %v1355
          %vm1362 = vmor %vm1360, %vm1361
          %v1363 = vsel %vm1362, %v1355, %v1359
          %v1364 = vand.u32 2147483647, %v1297
          %vm1365 = vcmp.eq.f32.partialorder %v1364, 8.507059e+37
          %v1366 = vand.u32 %v1297, 2147483648
          %v1367 = vor.u32 1.1754944e-38, %v1366
          %v1368 = vsel %vm1365, %v1367, %v1363
          %v1369 = vmul.f32 %v1284, %v1368
          %v1370 = vrcp.pop %v1298
          %v1371 = vmul.f32 %v1298, %v1370
          %v1372 = vsub.f32 1.0, %v1371
          %v1373 = vmul.f32 %v1370, %v1372
          %v1374 = vadd.f32 %v1370, %v1373
          %vm1375 = vweird.f32 %v1298
          %vm1376 = vweird.f32 %v1370
          %vm1377 = vmor %vm1375, %vm1376
          %v1378 = vsel %vm1377, %v1370, %v1374
          %v1379 = vand.u32 2147483647, %v1298
          %vm1380 = vcmp.eq.f32.partialorder %v1379, 8.507059e+37
          %v1381 = vand.u32 %v1298, 2147483648
          %v1382 = vor.u32 1.1754944e-38, %v1381
          %v1383 = vsel %vm1380, %v1382, %v1378
          %v1384 = vmul.f32 %v1285, %v1383
          %v1385 = vrcp.pop %v1299
          %v1386 = vmul.f32 %v1299, %v1385
          %v1387 = vsub.f32 1.0, %v1386
          %v1388 = vmul.f32 %v1385, %v1387
          %v1389 = vadd.f32 %v1385, %v1388
          %vm1390 = vweird.f32 %v1299
          %vm1391 = vweird.f32 %v1385
          %vm1392 = vmor %vm1390, %vm1391
          %v1393 = vsel %vm1392, %v1385, %v1389
          %v1394 = vand.u32 2147483647, %v1299
          %vm1395 = vcmp.eq.f32.partialorder %v1394, 8.507059e+37
          %v1396 = vand.u32 %v1299, 2147483648
          %v1397 = vor.u32 1.1754944e-38, %v1396
          %v1398 = vsel %vm1395, %v1397, %v1393
          %v1399 = vmul.f32 %v1286, %v1398
          %v1400 = vrcp.pop %v1300
          %v1401 = vmul.f32 %v1300, %v1400
          %v1402 = vsub.f32 1.0, %v1401
          %v1403 = vmul.f32 %v1400, %v1402
          %v1404 = vadd.f32 %v1400, %v1403
          %vm1405 = vweird.f32 %v1300
          %vm1406 = vweird.f32 %v1400
          %vm1407 = vmor %vm1405, %vm1406
          %v1408 = vsel %vm1407, %v1400, %v1404
          %v1409 = vand.u32 2147483647, %v1300
          %vm1410 = vcmp.eq.f32.partialorder %v1409, 8.507059e+37
          %v1411 = vand.u32 %v1300, 2147483648
          %v1412 = vor.u32 1.1754944e-38, %v1411
          %v1413 = vsel %vm1410, %v1412, %v1408
          %v1414 = vmul.f32 %v1287, %v1413
          %v1415 = vrcp.pop %v1301
          %v1416 = vmul.f32 %v1301, %v1415
          %v1417 = vsub.f32 1.0, %v1416
          %v1418 = vmul.f32 %v1415, %v1417
          %v1419 = vadd.f32 %v1415, %v1418
          %vm1420 = vweird.f32 %v1301
          %vm1421 = vweird.f32 %v1415
          %vm1422 = vmor %vm1420, %vm1421
          %v1423 = vsel %vm1422, %v1415, %v1419
          %v1424 = vand.u32 2147483647, %v1301
          %vm1425 = vcmp.eq.f32.partialorder %v1424, 8.507059e+37
          %v1426 = vand.u32 %v1301, 2147483648
          %v1427 = vor.u32 1.1754944e-38, %v1426
          %v1428 = vsel %vm1425, %v1427, %v1423
          %v1429 = vmul.f32 %v1288, %v1428
          %v1430 = vld [vmem:[%s2] sm:$0xff]
          %v1431 = vld [vmem:[%s2 + $0x8] sm:$0xff]
          %v1432 = vld [vmem:[%s2 + $0x10] sm:$0xff]
          %v1433 = vld [vmem:[%s2 + $0x18] sm:$0xff]
          %v1434 = vunpack.c.l.bf16 %v1430
          %v1435 = vunpack.c.h.bf16 %v1430
          %v1436 = vunpack.c.l.bf16 %v1431
          %v1437 = vunpack.c.h.bf16 %v1431
          %v1438 = vunpack.c.l.bf16 %v1432
          %v1439 = vunpack.c.h.bf16 %v1432
          %v1440 = vunpack.c.l.bf16 %v1433
          %v1441 = vunpack.c.h.bf16 %v1433
          %v1442 = vld [vmem:[%s3] sm:$0x3]
          %v1444 = vperm.slane %v1442, 0
          %v1445 = vperm.slane %v1442, 1
          %1456 = vst [vmem:[#allocation1] ss:$9 sm:$0xff] %v1324
          %s1457 = scalar_lea.vmem [#allocation1], 1
          %1458 = vst [vmem:[%s1457] ss:$9 sm:$0xff] %v1339
          %s1459 = scalar_lea.vmem [#allocation1], 2
          %1460 = vst [vmem:[%s1459] ss:$9 sm:$0xff] %v1354
          %s1461 = scalar_lea.vmem [#allocation1], 3
          %1462 = vst [vmem:[%s1461] ss:$9 sm:$0xff] %v1369
          %s1463 = scalar_lea.vmem [#allocation1], 4
          %1464 = vst [vmem:[%s1463] ss:$9 sm:$0xff] %v1384
          %s1465 = scalar_lea.vmem [#allocation1], 5
          %1466 = vst [vmem:[%s1465] ss:$9 sm:$0xff] %v1399
          %s1467 = scalar_lea.vmem [#allocation1], 6
          %1468 = vst [vmem:[%s1467] ss:$9 sm:$0xff] %v1414
          %s1469 = scalar_lea.vmem [#allocation1], 7
          %1470 = vst [vmem:[%s1469] ss:$9 sm:$0xff] %v1429
          %v1471 = vld [vmem:[#allocation1] sm:$0xff]
          %vm1472 = vcmask 261120
          %v1473 = vsel %vm1472, %v1471, 0
          %1475 = vmatpush.msra.mxu0 0.0
          %1476 = vmatpush.msra.mxu0 0.0
          %1477 = vmatpush.msra.mxu0 0.0
          %1478 = vmatpush.msra.mxu0 0.0
          %1479 = vmatpush.msra.mxu0 0.0
          %1480 = vmatpush.msra.mxu0 0.0
          %1481 = vmatpush.msra.mxu0 0.0
          %1482 = vmatpush.msra.mxu0 0.0
          %1483 = vmatpush.msra.mxu0 0.0
          %1484 = vmatpush.msra.mxu0 0.0
          %1485 = vmatpush.msra.mxu0 0.0
          %1486 = vmatpush.msra.mxu0 0.0
          %1487 = vmatpush.msra.mxu0 %v1440
          %1488 = vmatpush.msra.mxu0 %v1438
          %1489 = vmatpush.msra.mxu0 %v1436
          %1490 = vmatpush.msra.mxu0 %v1434
          %1491 = vmatmul.f32.gmra.mxu0 %v1473
          %v1492 = vpop.f32.mrf.mxu0
          %v1493 = vadd.f32 %v1444, %v1492
          %1494 = vdwg.mxu0
          %1495 = vmatpush.msra.mxu0 0.0
          %1496 = vmatpush.msra.mxu0 0.0
          %1497 = vmatpush.msra.mxu0 0.0
          %1498 = vmatpush.msra.mxu0 0.0
          %1499 = vmatpush.msra.mxu0 0.0
          %1500 = vmatpush.msra.mxu0 0.0
          %1501 = vmatpush.msra.mxu0 0.0
          %1502 = vmatpush.msra.mxu0 0.0
          %1503 = vmatpush.msra.mxu0 0.0
          %1504 = vmatpush.msra.mxu0 0.0
          %1505 = vmatpush.msra.mxu0 0.0
          %1506 = vmatpush.msra.mxu0 0.0
          %1507 = vmatpush.msra.mxu0 %v1441
          %1508 = vmatpush.msra.mxu0 %v1439
          %1509 = vmatpush.msra.mxu0 %v1437
          %1510 = vmatpush.msra.mxu0 %v1435
          %1511 = vmatmul.f32.gmra.mxu0 %v1473
          %v1512 = vpop.f32.mrf.mxu0
          %v1513 = vadd.f32 %v1445, %v1512
          %1514 = vdwg.mxu0
          %v1515 = vld [vmem:[%s937] sm:$0xff]
          %1516 = vmax.xlane.f32.xlu0 %v1493
          %v1517 = vpop.xlane.xlu0 %1516
          %v1518 = vsub.f32 %v1493, %v1517
          %v1519 = vmul.f32 %v1518, 1.442695
          %v1520 = vpow.pop %v1519
          %1521 = vadd.xlane.f32.xlu0 %v1520
          %v1522 = vpop.xlane.xlu0 %1521
          %v1523 = vlog2.pop %v1522
          %v1524 = vmul.f32 %v1523, 0.6931472
          %v1525 = vadd.f32 %v1524, %v1517
          %v1526 = vlaneseq
          %v1527 = vand.u32 %v1526, 127
          %1528 = vset.pattern.permute.xlu0 0
          %1529 = vperm.xlu0 %1528, %v1515
          %v1530 = vpop.permute.xlu0 %1529
          %vm1531 = vcmp.eq.s32.totalorder %v1527, %v1530
          %v1532 = vsel %vm1531, 1, 0
          %v1533 = vcvt.s32.f32 %v1532
          %v1534 = vmul.f32 %v1493, %v1533
          %1535 = vadd.xlane.f32.xlu0 %v1534
          %v1536 = vpop.xlane.xlu0 %1535
          %v1537 = vsub.f32 %v1525, %v1536
          %v1538 = vmul.f32 %v1537, %v1280
          %1539 = vmax.xlane.f32.xlu0 %v1513
          %v1540 = vpop.xlane.xlu0 %1539
          %v1541 = vsub.f32 %v1513, %v1540
          %v1542 = vmul.f32 %v1541, 1.442695
          %v1543 = vpow.pop %v1542
          %1544 = vadd.xlane.f32.xlu0 %v1543
          %v1545 = vpop.xlane.xlu0 %1544
          %v1546 = vlog2.pop %v1545
          %v1547 = vmul.f32 %v1546, 0.6931472
          %v1548 = vadd.f32 %v1547, %v1540
          %1549 = vset.pattern.permute.xlu0 1
          %1550 = vperm.xlu0 %1549, %v1515
          %v1551 = vpop.permute.xlu0 %1550
          %vm1552 = vcmp.eq.s32.totalorder %v1527, %v1551
          %v1553 = vsel %vm1552, 1, 0
          %v1554 = vcvt.s32.f32 %v1553
          %v1555 = vmul.f32 %v1513, %v1554
          %1556 = vadd.xlane.f32.xlu0 %v1555
          %v1557 = vpop.xlane.xlu0 %1556
          %v1558 = vsub.f32 %v1548, %v1557
          %vm1559 = vcmp.eq.s32.totalorder %v1527, 0
          %vm1560 = vcmask 7168
          %v1561 = vsel %vm1560, %v1538, 0.0
          %1562 = vadd.xlane.f32.xlu0 %v1561
          %v1563 = vpop.xlane.xlu0 %1562
          %v1564 = vrot.slane %v1563, 4
          %v1565 = vadd.f32 %v1563, %v1564
          %v1566 = vrot.slane %v1565, 2
          %v1567 = vadd.f32 %v1565, %v1566
          %v1568 = vrot.slane %v1567, 1
          %v1569 = vadd.f32 %v1567, %v1568
          %s1570 = vtos %v1569
          %vm1571 = vcmp.eq.s32.totalorder %v1527, 1
          %v1572 = vsel %vm1560, %v1558, 0.0
          %1573 = vadd.xlane.f32.xlu0 %v1572
          %v1574 = vpop.xlane.xlu0 %1573
          %v1575 = vrot.slane %v1574, 4
          %v1576 = vadd.f32 %v1574, %v1575
          %v1577 = vrot.slane %v1576, 2
          %v1578 = vadd.f32 %v1576, %v1577
          %v1579 = vrot.slane %v1578, 1
          %v1580 = vadd.f32 %v1578, %v1579
          %s1581 = vtos %v1580
          %v1582 = vstv %s1581
          %v1583 = vsel %vm1571, %v1582, 0.0
          %v1584 = vstv %s1570
          %v1585 = vsel %vm1559, %v1584, %v1583
          %1586 = vst [vmem:[%s930] sm:$0x1] %v1585
        $region131: #{tpu_custom_call.1} parent=114 // pred_fallthru
          _
        %s1587 = sand.u32 %s190, 1
        %s1588 = scalar_lea.sflag [#allocation6], %s1587
        %s1589 = sand.u32 %s190, 1
        %s1590 = scalar_lea.vmem [#allocation5], %s1589
        // Predicated region
        $region132: #{tpu_custom_call.1} parent=114 // pred_check
          %p1591 = pneg %p200
        $region133: #{tpu_custom_call.1} parent=114 // pred_check_branch
          %1593 = sbr.rel (%p1591) target = $region135
        $region134: #{tpu_custom_call.1} parent=114 // pred_region
          %1595 = vsyncadd %s1588, 0
          %s1596 = scalar_lea.hbm %s6, %s24
          %s1598 = sshll.u32 %s1590, 4
          %s1599 = int_to_ptr.vmem [resolvable:$true] %s1598
          %s1600 = sshll.u32 %s1596, 4
          %s1601 = int_to_ptr.hbm [resolvable:$true] %s1600
          %1603 = dma.vmem_to_hbm [thread:$0]  %s1599, 16, %s1601, %s1588
        $region135: #{tpu_custom_call.1} parent=114 // pred_fallthru
          _
      $region115: #{tpu_custom_call.1} parent=5 // pred_fallthru
        _
      %p1604 = scmp.le.s32.totalorder 2, %s15
      // Predicated region
      $region136: #{tpu_custom_call.1} parent=5 // pred_check
        %p1605 = pneg %p1604
      $region137: #{tpu_custom_call.1} parent=5 // pred_check_branch
        %1607 = sbr.rel (%p1605) target = $region139
      $region138: #{tpu_custom_call.1} parent=5 // pred_region
        %s1608 = ssub.s32 %s15, 2
        // Predicated region
        $region140: #{tpu_custom_call.1} parent=138 // pred_check
          %p1609 = pneg %p206
        $region141: #{tpu_custom_call.1} parent=138 // pred_check_branch
          %1611 = sbr.rel (%p1609) target = $region143
        $region142: #{tpu_custom_call.1} parent=138 // pred_region
          %s1612 = sand.u32 %s191, 1
          %s1613 = scalar_lea.sflag [#allocation6], %s1612
          %s1614 = sand.u32 %s191, 1
          %s1615 = scalar_lea.vmem [#allocation5], %s1614
          %1617 = dma.done %s1613, 16
        $region143: #{tpu_custom_call.1} parent=138 // pred_fallthru
          _
      $region139: #{tpu_custom_call.1} parent=5 // pred_fallthru
        _
    $region6: #{tpu_custom_call.1} parent=1 // loop_footer
      %s19 = sadd.s32 1, %s15
    $region7: #{tpu_custom_call.1} parent=1 // loop_footer_branch
      %14 = sbr.rel target = $region3
    $region8: #{tpu_custom_call.1} parent=1 // loop_exit
      _
    %1618 = vsyncpa [#allocation6], 1
    %s1619 = scalar_lea.sflag [#allocation6], 1
    %1620 = vsyncpa %s1619, 1

</llo_original>
